<compile_context>
chip_gen: v7x
topology: tpu7x:2x2x1
jax: 0.10.0
libtpu: 0.0.40
codegen_flags: <defaults>
</compile_context>

<pallas_src>
import functools
import math

import jax
import jax.numpy as jnp
from jax.experimental import pallas as pl
from jax.experimental.pallas import tpu as pltpu

IMAGENET_MEAN = (0.485, 0.456, 0.406)
IMAGENET_STD = (0.229, 0.224, 0.225)


def _softplus(x):
    # numerically stable softplus (matches F.softplus semantics for our range)
    return jnp.where(x > 20.0, x, jnp.log1p(jnp.exp(jnp.minimum(x, 20.0))))


def classifier_kernel(x_ref, wbp_ref, bbp_ref, wg_ref, bg_ref,
                      wcat_ref, bcat_ref, out_ref, xsum_ref, *,
                      inv_spatial, num_classes):
    step = pl.program_id(0)

    @pl.when(step == 0)
    def _init():
        xsum_ref[...] = jnp.zeros_like(xsum_ref)

    # --- AdaptiveAvgPool2d(1) as a streaming spatial-sum reduction --------------
    # x tile is (N, C, tile_S); sum over the lane axis, accumulate into (N, C).
    xsum_ref[...] += jnp.sum(x_ref[...], axis=-1)

    @pl.when(step == pl.num_programs(0) - 1)
    def _finalize():
        # pooled mean of the raw image; RGBNorm is folded into wbp/bbp, and the
        # linear synthetic backbone commutes with pooling (pool-first reorder).
        xmean = xsum_ref[...] * inv_spatial                                  # (N, C)

        # synthetic backbone 1x1 conv (+ folded RGBNorm): (N, C) @ (C, OC)
        feat = jnp.dot(xmean, wbp_ref[...],
                       preferred_element_type=jnp.float32) + bbp_ref[...]    # (N, OC)

        # gfc: Linear(OC -> 2048) in bf16 (f32 accumulate) + Mish in f32
        h = jnp.dot(feat.astype(wg_ref.dtype), wg_ref[...],
                    preferred_element_type=jnp.float32) + bg_ref[...]        # (N, 2048)
        h = h * jnp.tanh(_softplus(h))                                       # Mish

        # fused cls_head + ArcMarginProduct: single MXU pass over the 2048 axis.
        # wcat = [wc | watn_pre-normalized]; metric columns get 1/||h|| row scale.
        z = jnp.dot(h.astype(wcat_ref.dtype), wcat_ref[...],
                    preferred_element_type=jnp.float32) + bcat_ref[...]      # (N, 2*NC)
        inv_hnorm = jax.lax.rsqrt(
            jnp.maximum(jnp.sum(h * h, axis=1, keepdims=True), 1e-24))       # (N, 1)
        col = jax.lax.broadcasted_iota(jnp.int32, z.shape, 1)
        out_ref[...] = jnp.where(col < num_classes, z, z * inv_hnorm)


def init_params(key, in_ch=3, out_channel=32, hidden=2048, num_classes=4):
    """Deterministic synthetic parameters (shapes follow the module's __init__)."""
    ks = jax.random.split(key, 7)

    def unif(k, shape, fan_in):
        bound = 1.0 / math.sqrt(fan_in)
        return jax.random.uniform(k, shape, jnp.float32, -bound, bound)

    return dict(
        # backbone: 1x1 conv weight stored as (C_in, out_channel), bias (1, out_channel)
        wb=unif(ks[0], (in_ch, out_channel), in_ch),
        bb=unif(ks[1], (1, out_channel), in_ch),
        # gfc Linear(out_channel, 2048)
        wg=unif(ks[2], (out_channel, hidden), out_channel),
        bg=unif(ks[3], (1, hidden), out_channel),
        # cls_head Linear(2048, num_classes)
        wc=unif(ks[4], (hidden, num_classes), hidden),
        bc=unif(ks[5], (1, num_classes), hidden),
        # ArcMarginProduct weight (num_classes, 2048), stored transposed (2048, num_classes)
        wat=unif(ks[6], (hidden, num_classes), hidden),
    )


def prepare_params(params):
    """Loop-invariant preprocessing: fold RGBNorm into the conv, pre-normalize
    the ArcMargin weight, fuse the two heads, cast the wide weights to bf16."""
    mean = jnp.asarray(IMAGENET_MEAN, jnp.float32)
    std = jnp.asarray(IMAGENET_STD, jnp.float32)

    wb, bb = params["wb"], params["bb"]                       # (C, OC), (1, OC)
    wbp = wb / std[:, None]                                   # fold 1/std
    bbp = bb - (mean / std)[None, :] @ wb                     # fold -mean/std

    wat = params["wat"]                                       # (2048, NC) == W^T
    wnorm = jnp.sqrt(jnp.sum(wat * wat, axis=0, keepdims=True))
    watn = wat / jnp.maximum(wnorm, 1e-12)                    # F.normalize(W) (static)

    wcat = jnp.concatenate([params["wc"], watn], axis=1).astype(jnp.bfloat16)
    bcat = jnp.concatenate([params["bc"], jnp.zeros_like(params["bc"])], axis=1)

    return dict(
        wbp=wbp.astype(jnp.float32),
        bbp=bbp.astype(jnp.float32),
        wg=params["wg"].astype(jnp.bfloat16),
        bg=params["bg"].astype(jnp.float32),
        wcat=wcat,
        bcat=bcat.astype(jnp.float32),
    )


def classifier_forward(x_nchw, prep):
    N, C, H, W = x_nchw.shape
    if C == 1:  # RGBNorm grayscale -> RGB repeat (glue, not hot path)
        x_nchw = jnp.tile(x_nchw, (1, 3, 1, 1))
        C = 3
    S = H * W
    # NCHW is already channel-major: reshape only, no HBM transpose pass.
    x3d = x_nchw.reshape(N, C, S).astype(jnp.float32)

    # Spatial tile: lane-aligned (multiple of 128) divisor of S with >= 2 grid
    # steps so the pooled-sum accumulator is actually pipelined; fall back to S.
    # In a real deployment you'd pad S and pick the largest VMEM-fitting tile.
    tile = S
    for cand in (1024, 512, 256, 128):
        if S % cand == 0 and S // cand >= 2:
            tile = cand
            break
    grid = (S // tile,)

    OC = prep["wbp"].shape[1]
    HID = prep["wg"].shape[1]
    NC2 = prep["wcat"].shape[1]
    num_classes = NC2 // 2

    kernel = functools.partial(classifier_kernel,
                               inv_spatial=1.0 / S,
                               num_classes=num_classes)

    def full_spec(arr):
        return pl.BlockSpec(arr.shape, lambda s: (0,) * arr.ndim)

    weight_bytes = sum(int(v.size) * v.dtype.itemsize for v in prep.values())
    cost = pl.CostEstimate(
        flops=int(N * C * S + 2 * N * C * OC + 2 * N * OC * HID
                  + 2 * N * HID * NC2 + 10 * N * HID),
        transcendentals=int(2 * N * HID),
        bytes_accessed=int(x3d.size * 4 + weight_bytes + N * NC2 * 4),
    )

    z = pl.pallas_call(
        kernel,
        out_shape=jax.ShapeDtypeStruct((N, NC2), jnp.float32),
        grid_spec=pltpu.PrefetchScalarGridSpec(
            num_scalar_prefetch=0,
            grid=grid,
            in_specs=[
                pl.BlockSpec((N, C, tile), lambda s: (0, 0, s)),   # streamed image
                full_spec(prep["wbp"]), full_spec(prep["bbp"]),
                full_spec(prep["wg"]), full_spec(prep["bg"]),
                full_spec(prep["wcat"]), full_spec(prep["bcat"]),
            ],
            out_specs=pl.BlockSpec((N, NC2), lambda s: (0, 0)),
            scratch_shapes=[pltpu.VMEM((N, C), jnp.float32)],       # pooled-sum acc
        ),
        compiler_params=pltpu.CompilerParams(
            dimension_semantics=("arbitrary",),                     # reduction axis
            vmem_limit_bytes=32 * 1024 * 1024,
        ),
        cost_estimate=cost,
    )(x3d, prep["wbp"], prep["bbp"], prep["wg"], prep["bg"],
      prep["wcat"], prep["bcat"])

    # split the fused lane-dense output: cls_head logits | ArcMargin cosine
    return z[:, :num_classes], z[:, num_classes:]


if __name__ == "__main__":
    key = jax.random.PRNGKey(0)
    xkey, pkey = jax.random.split(key)
    # PyTorch-convention NCHW input, small spatial size, image-like values in [0, 1]
    x = jax.random.uniform(xkey, (2, 3, 16, 16), jnp.float32)
    params = init_params(pkey, in_ch=3, out_channel=32, hidden=2048, num_classes=4)
    prep = prepare_params(params)

    out, metric = classifier_forward(x, prep)
    jax.block_until_ready((out, metric))
    assert out.shape == (2, 4) and metric.shape == (2, 4)
    assert bool(jnp.all(jnp.isfinite(out))) and bool(jnp.all(jnp.isfinite(metric)))
    print("KERNEL_OK")
</pallas_src>

<mosaic_0001>
module attributes {stable_mosaic.version = 11 : i64} {
  func.func @classifier_kernel(%arg0: i32, %arg1: memref<2x3x128xf32, #tpu.memory_space<vmem>>, %arg2: memref<3x32xf32, #tpu.memory_space<vmem>>, %arg3: memref<1x32xf32, #tpu.memory_space<vmem>>, %arg4: memref<32x2048xbf16, #tpu.memory_space<vmem>>, %arg5: memref<1x2048xf32, #tpu.memory_space<vmem>>, %arg6: memref<2048x8xbf16, #tpu.memory_space<vmem>>, %arg7: memref<1x8xf32, #tpu.memory_space<vmem>>, %arg8: memref<2x8xf32, #tpu.memory_space<vmem>>, %arg9: memref<2x3xf32, #tpu.memory_space<vmem>>) attributes {dimension_semantics = [#tpu.dimension_semantics<arbitrary>], iteration_bounds = array<i64: 2>, scalar_prefetch = 0 : i64, scratch_operands = 1 : i64, tpu.core_type = #tpu.core_type<tc>, window_params = [{transform_indices = @transform_0, window_bounds = array<i64: 2, 3, 128>}, {pipeline_mode = #tpu.pipeline_mode<synchronous>, transform_indices = @transform_1, window_bounds = array<i64: 3, 32>}, {pipeline_mode = #tpu.pipeline_mode<synchronous>, transform_indices = @transform_2, window_bounds = array<i64: 1, 32>}, {pipeline_mode = #tpu.pipeline_mode<synchronous>, transform_indices = @transform_3, window_bounds = array<i64: 32, 2048>}, {pipeline_mode = #tpu.pipeline_mode<synchronous>, transform_indices = @transform_4, window_bounds = array<i64: 1, 2048>}, {pipeline_mode = #tpu.pipeline_mode<synchronous>, transform_indices = @transform_5, window_bounds = array<i64: 2048, 8>}, {pipeline_mode = #tpu.pipeline_mode<synchronous>, transform_indices = @transform_6, window_bounds = array<i64: 1, 8>}, {pipeline_mode = #tpu.pipeline_mode<synchronous>, transform_indices = @transform_7, window_bounds = array<i64: 2, 8>}]} {
    %c0_i32 = arith.constant 0 : i32
    %0 = arith.cmpi eq, %arg0, %c0_i32 : i32
    %1 = arith.extui %0 : i1 to i32
    %c0_i32_0 = arith.constant 0 : i32
    %2 = arith.cmpi ne, %1, %c0_i32_0 : i32
    scf.if %2 {
      %cst_8 = arith.constant 0.000000e+00 : f32
      %11 = vector.broadcast %cst_8 : f32 to vector<2x3xf32>
      %c0_9 = arith.constant 0 : index
      %c0_10 = arith.constant 0 : index
      %12 = vector.load %arg9[%c0_9, %c0_10] : memref<2x3xf32, #tpu.memory_space<vmem>>, vector<2x3xf32>
      tpu.vector_store %arg9[%c0_9, %c0_10], %11 {strides = array<i32>} : memref<2x3xf32, #tpu.memory_space<vmem>>, vector<2x3xf32>,
    } else {
    }
    %c0 = arith.constant 0 : index
    %c0_1 = arith.constant 0 : index
    %3 = vector.load %arg9[%c0, %c0_1] : memref<2x3xf32, #tpu.memory_space<vmem>>, vector<2x3xf32>
    %c0_2 = arith.constant 0 : index
    %c0_3 = arith.constant 0 : index
    %c0_4 = arith.constant 0 : index
    %4 = vector.load %arg1[%c0_2, %c0_3, %c0_4] : memref<2x3x128xf32, #tpu.memory_space<vmem>>, vector<2x3x128xf32>
    %cst = arith.constant dense<0.000000e+00> : vector<2x3xf32>
    %5 = vector.multi_reduction <add>, %4, %cst [2] : vector<2x3x128xf32> to vector<2x3xf32>
    %6 = arith.addf %3, %5 : vector<2x3xf32>
    %c0_5 = arith.constant 0 : index
    %c0_6 = arith.constant 0 : index
    %7 = vector.load %arg9[%c0_5, %c0_6] : memref<2x3xf32, #tpu.memory_space<vmem>>, vector<2x3xf32>
    tpu.vector_store %arg9[%c0_5, %c0_6], %6 {strides = array<i32>} : memref<2x3xf32, #tpu.memory_space<vmem>>, vector<2x3xf32>,
    %c1_i32 = arith.constant 1 : i32
    %8 = arith.cmpi eq, %arg0, %c1_i32 : i32
    %9 = arith.extui %8 : i1 to i32
    %c0_i32_7 = arith.constant 0 : i32
    %10 = arith.cmpi ne, %9, %c0_i32_7 : i32
    scf.if %10 {
      %c0_8 = arith.constant 0 : index
      %c0_9 = arith.constant 0 : index
      %11 = vector.load %arg9[%c0_8, %c0_9] : memref<2x3xf32, #tpu.memory_space<vmem>>, vector<2x3xf32>
      %cst_10 = arith.constant 3.906250e-03 : f32
      %12 = vector.broadcast %cst_10 : f32 to vector<2x3xf32>
      %13 = arith.mulf %11, %12 : vector<2x3xf32>
      %c0_11 = arith.constant 0 : index
      %c0_12 = arith.constant 0 : index
      %14 = vector.load %arg2[%c0_11, %c0_12] : memref<3x32xf32, #tpu.memory_space<vmem>>, vector<3x32xf32>
      %cst_13 = arith.constant dense<0.000000e+00> : vector<2x32xf32>
      %15 = tpu.matmul %13, %14, %cst_13 {dimension_numbers = #tpu.dot_dimension_numbers<[1], [0], [0], [1], [0, 0, 1, 1], [], []>} : vector<2x3xf32>, vector<3x32xf32>, vector<2x32xf32> -> vector<2x32xf32>
      %c0_14 = arith.constant 0 : index
      %c0_15 = arith.constant 0 : index
      %16 = vector.load %arg3[%c0_14, %c0_15] : memref<1x32xf32, #tpu.memory_space<vmem>>, vector<1x32xf32>
      %17 = vector.broadcast %16 : vector<1x32xf32> to vector<2x32xf32>
      %18 = arith.addf %15, %17 : vector<2x32xf32>
      %19 = arith.truncf %18 : vector<2x32xf32> to vector<2x32xbf16>
      %c0_16 = arith.constant 0 : index
      %c0_17 = arith.constant 0 : index
      %20 = vector.load %arg4[%c0_16, %c0_17] : memref<32x2048xbf16, #tpu.memory_space<vmem>>, vector<32x2048xbf16>
      %cst_18 = arith.constant dense<0.000000e+00> : vector<2x2048xf32>
      %21 = tpu.matmul %19, %20, %cst_18 {dimension_numbers = #tpu.dot_dimension_numbers<[1], [0], [0], [1], [0, 0, 1, 1], [], []>} : vector<2x32xbf16>, vector<32x2048xbf16>, vector<2x2048xf32> -> vector<2x2048xf32>
      %c0_19 = arith.constant 0 : index
      %c0_20 = arith.constant 0 : index
      %22 = vector.load %arg5[%c0_19, %c0_20] : memref<1x2048xf32, #tpu.memory_space<vmem>>, vector<1x2048xf32>
      %23 = vector.broadcast %22 : vector<1x2048xf32> to vector<2x2048xf32>
      %24 = arith.addf %21, %23 : vector<2x2048xf32>
      %cst_21 = arith.constant 2.000000e+01 : f32
      %25 = vector.broadcast %cst_21 : f32 to vector<2x2048xf32>
      %26 = arith.cmpf ogt, %24, %25 : vector<2x2048xf32>
      %cst_22 = arith.constant 2.000000e+01 : f32
      %27 = vector.broadcast %cst_22 : f32 to vector<2x2048xf32>
      %28 = arith.minimumf %24, %27 : vector<2x2048xf32>
      %29 = math.exp %28 : vector<2x2048xf32>
      %30 = math.log1p %29 : vector<2x2048xf32>
      %31 = arith.select %26, %24, %30 : vector<2x2048xi1>, vector<2x2048xf32>
      %32 = math.tanh %31 : vector<2x2048xf32>
      %33 = arith.mulf %24, %32 : vector<2x2048xf32>
      %34 = arith.truncf %33 : vector<2x2048xf32> to vector<2x2048xbf16>
      %c0_23 = arith.constant 0 : index
      %c0_24 = arith.constant 0 : index
      %35 = vector.load %arg6[%c0_23, %c0_24] : memref<2048x8xbf16, #tpu.memory_space<vmem>>, vector<2048x8xbf16>
      %cst_25 = arith.constant dense<0.000000e+00> : vector<2x8xf32>
      %36 = tpu.matmul %34, %35, %cst_25 {dimension_numbers = #tpu.dot_dimension_numbers<[1], [0], [0], [1], [0, 0, 1, 1], [], []>} : vector<2x2048xbf16>, vector<2048x8xbf16>, vector<2x8xf32> -> vector<2x8xf32>
      %c0_26 = arith.constant 0 : index
      %c0_27 = arith.constant 0 : index
      %37 = vector.load %arg7[%c0_26, %c0_27] : memref<1x8xf32, #tpu.memory_space<vmem>>, vector<1x8xf32>
      %38 = vector.broadcast %37 : vector<1x8xf32> to vector<2x8xf32>
      %39 = arith.addf %36, %38 : vector<2x8xf32>
      %40 = arith.mulf %33, %33 : vector<2x2048xf32>
      %cst_28 = arith.constant dense<0.000000e+00> : vector<2xf32>
      %41 = vector.multi_reduction <add>, %40, %cst_28 [1] : vector<2x2048xf32> to vector<2xf32>
      %42 = vector.shape_cast %41 : vector<2xf32> to vector<2x1xf32>
      %cst_29 = arith.constant 1.000000e-24 : f32
      %43 = vector.broadcast %cst_29 : f32 to vector<2x1xf32>
      %44 = arith.maximumf %42, %43 : vector<2x1xf32>
      %45 = math.rsqrt %44 : vector<2x1xf32>
      %46 = tpu.iota {dimensions = array<i32: 1>} : vector<2x8xi32>
      %c4_i32 = arith.constant 4 : i32
      %47 = vector.broadcast %c4_i32 : i32 to vector<2x8xi32>
      %48 = arith.cmpi slt, %46, %47 : vector<2x8xi32>
      %49 = vector.broadcast %45 : vector<2x1xf32> to vector<2x8xf32>
      %50 = arith.mulf %39, %49 : vector<2x8xf32>
      %51 = arith.select %48, %39, %50 : vector<2x8xi1>, vector<2x8xf32>
      %c0_30 = arith.constant 0 : index
      %c0_31 = arith.constant 0 : index
      %52 = vector.load %arg8[%c0_30, %c0_31] : memref<2x8xf32, #tpu.memory_space<vmem>>, vector<2x8xf32>
      tpu.vector_store %arg8[%c0_30, %c0_31], %51 {strides = array<i32>} : memref<2x8xf32, #tpu.memory_space<vmem>>, vector<2x8xf32>,
    } else {
    }
    return
  }
  func.func @transform_0(%arg0: i32) -> (i32, i32, i32) {
    %c0_i32 = arith.constant 0 : i32
    %c0_i32_0 = arith.constant 0 : i32
    %c0_i32_1 = arith.constant 0 : i32
    return %c0_i32, %c0_i32_0, %arg0 : i32, i32, i32
  }
  func.func @transform_1(%arg0: i32) -> (i32, i32) {
    %c0_i32 = arith.constant 0 : i32
    %c0_i32_0 = arith.constant 0 : i32
    %c0_i32_1 = arith.constant 0 : i32
    return %c0_i32, %c0_i32_0 : i32, i32
  }
  func.func @transform_2(%arg0: i32) -> (i32, i32) {
    %c0_i32 = arith.constant 0 : i32
    %c0_i32_0 = arith.constant 0 : i32
    %c0_i32_1 = arith.constant 0 : i32
    return %c0_i32, %c0_i32_0 : i32, i32
  }
  func.func @transform_3(%arg0: i32) -> (i32, i32) {
    %c0_i32 = arith.constant 0 : i32
    %c0_i32_0 = arith.constant 0 : i32
    %c0_i32_1 = arith.constant 0 : i32
    return %c0_i32, %c0_i32_0 : i32, i32
  }
  func.func @transform_4(%arg0: i32) -> (i32, i32) {
    %c0_i32 = arith.constant 0 : i32
    %c0_i32_0 = arith.constant 0 : i32
    %c0_i32_1 = arith.constant 0 : i32
    return %c0_i32, %c0_i32_0 : i32, i32
  }
  func.func @transform_5(%arg0: i32) -> (i32, i32) {
    %c0_i32 = arith.constant 0 : i32
    %c0_i32_0 = arith.constant 0 : i32
    %c0_i32_1 = arith.constant 0 : i32
    return %c0_i32, %c0_i32_0 : i32, i32
  }
  func.func @transform_6(%arg0: i32) -> (i32, i32) {
    %c0_i32 = arith.constant 0 : i32
    %c0_i32_0 = arith.constant 0 : i32
    %c0_i32_1 = arith.constant 0 : i32
    return %c0_i32, %c0_i32_0 : i32, i32
  }
  func.func @transform_7(%arg0: i32) -> (i32, i32) {
    %c0_i32 = arith.constant 0 : i32
    %c0_i32_0 = arith.constant 0 : i32
    %c0_i32_1 = arith.constant 0 : i32
    return %c0_i32, %c0_i32_0 : i32, i32
  }
}

</mosaic_0001>

<llo_original>
// kernel: tpu_custom_call.1
$region0: #{tpu_custom_call.1}
  #allocation0 [shape = 'u32[]', space=smem, size = 0x4, offset = 0x4, fixed_abs, tag = 'smem constant byte address 0x4 - core index']
  #allocation1 [shape = 'u32[144,128]{1,0:T(1,128)}', space=vmem, size = 0x12000, scoped, tag = 'internal scratch']
  #allocation2 [shape = 'f32[2,3]{1,0:T(2,128)}', space=vmem, size = 0x400, scoped, tag = 'scratch operand']
  %s0 = inlined_call_operand.vmem [shape: f32[2,3,256], index: 0, kind: input, shape index: {}]
  %s1 = inlined_call_operand.vmem [shape: f32[3,32], index: 1, kind: input, shape index: {}]
  %s2 = inlined_call_operand.vmem [shape: f32[1,32], index: 2, kind: input, shape index: {}]
  %s3 = inlined_call_operand.vmem [shape: bf16[32,2048], index: 3, kind: input, shape index: {}]
  %s4 = inlined_call_operand.vmem [shape: f32[1,2048], index: 4, kind: input, shape index: {}]
  %s5 = inlined_call_operand.vmem [shape: bf16[2048,8], index: 5, kind: input, shape index: {}]
  %s6 = inlined_call_operand.vmem [shape: f32[1,8], index: 6, kind: input, shape index: {}]
  %s7 = inlined_call_operand.hbm [shape: f32[2,8], index: 7, kind: output, shape index: {}]
  %s8 = sld [smem:[#allocation0]]
  $region110: #{tpu_custom_call.1} parent=0
    _
  %s10 = ssub.s32 1, %s8
  %s11 = scalar_select 0, %s10, %s8
  $region1: #{tpu_custom_call.1} parent=0
    #allocation3 [shape = 'u8[8192]{0}', space=vmem, size = 0x2000, scoped, tag = 'input window, operand 0']
    #allocation4 [shape = 'u8[1024]{0}', space=vmem, size = 0x400, scoped, tag = 'output window, operand 0, single buffered']
    #allocation5 [shape = 's32[2]{0}', space=sflag, size = 0x8, scoped, tag = 'scoped memory for tpu_custom_call.1']
    %12 = vsyncpa [#allocation5], 0
    loop: start=0, step=1, limit=4
    $region2: #{tpu_custom_call.1} parent=1 // loop_pre_header
      _
    $region3: #{tpu_custom_call.1} parent=1 // loop_header
      %s14 = sphi 0, %s18
      %p15 = scmp.ge.s32.totalorder %s14, 4
      %s24 = sphi 0, %s26
      %s27 = sphi 0, %s24
      %s28 = sphi 0, %s27
      %s44 = sphi 0, %s28
      %s48 = sphi 0, %s48
      %s50 = sphi 0, %s48
      %s51 = sphi 0, %s50
      %s65 = sphi 0, %s51
      %s69 = sphi 0, %s69
      %s71 = sphi 0, %s69
      %s72 = sphi 0, %s71
      %s86 = sphi 0, %s72
      %s90 = sphi 0, %s90
      %s92 = sphi 0, %s90
      %s93 = sphi 0, %s92
      %s107 = sphi 0, %s93
      %s111 = sphi 0, %s111
      %s113 = sphi 0, %s111
      %s114 = sphi 0, %s113
      %s128 = sphi 0, %s114
      %s132 = sphi 0, %s132
      %s134 = sphi 0, %s132
      %s135 = sphi 0, %s134
      %s149 = sphi 0, %s135
      %s153 = sphi 0, %s153
      %s155 = sphi 0, %s153
      %s156 = sphi 0, %s155
      %s170 = sphi 0, %s156
      %s174 = sphi 0, %s174
      %s176 = sphi 0, %s174
      %s177 = sphi 0, %s176
      %s191 = sphi 0, %s177
    $region4: #{tpu_custom_call.1} parent=1 // loop_header_branch
      %17 = sbr.rel (%p15) target = $region8
    $region5: #{tpu_custom_call.1} parent=1 // loop_body
      %s19 = ssub.s32 %s14, 1
      %s20 = ssub.s32 %s14, 2
      %s21 = sadd.s32 %s14, 1
      %s22 = ssub.s32 %s14, %s21
      %p23 = scmp.eq.s32.totalorder %s22, 0
      %s25 = sadd.s32 %s24, 1
      %s26 = scalar_select %p23, %s24, %s25
      %p29 = pneg %p23
      %p30 = scmp.eq.s32.totalorder %s14, 1
      %p31 = por %p29, %p30
      %p32 = scmp.ne.s32.totalorder %s24, %s27
      %p33 = scmp.eq.s32.totalorder %s14, 0
      %p34 = por %p32, %p33
      %p35 = scmp.ne.s32.totalorder %s24, %s27
      %p36 = scmp.eq.s32.totalorder %s19, 1
      %p37 = por %p35, %p36
      %p38 = scmp.ne.s32.totalorder %s27, %s28
      %p39 = scmp.eq.s32.totalorder %s19, 0
      %p40 = por %p38, %p39
      %p41 = scmp.ne.s32.totalorder %s27, %s28
      %p42 = scmp.eq.s32.totalorder %s20, 1
      %p43 = por %p41, %p42
      %p45 = scmp.ne.s32.totalorder %s28, %s44
      %p46 = scmp.eq.s32.totalorder %s20, 0
      %p47 = por %p45, %p46
      %s49 = sadd.s32 %s48, 1
      %p52 = scmp.eq.s32.totalorder %s14, 1
      %p53 = scmp.ne.s32.totalorder %s48, %s50
      %p54 = scmp.eq.s32.totalorder %s14, 0
      %p55 = por %p53, %p54
      %p56 = scmp.ne.s32.totalorder %s48, %s50
      %p57 = scmp.eq.s32.totalorder %s19, 1
      %p58 = por %p56, %p57
      %p59 = scmp.ne.s32.totalorder %s50, %s51
      %p60 = scmp.eq.s32.totalorder %s19, 0
      %p61 = por %p59, %p60
      %p62 = scmp.ne.s32.totalorder %s50, %s51
      %p63 = scmp.eq.s32.totalorder %s20, 1
      %p64 = por %p62, %p63
      %p66 = scmp.ne.s32.totalorder %s51, %s65
      %p67 = scmp.eq.s32.totalorder %s20, 0
      %p68 = por %p66, %p67
      %s70 = sadd.s32 %s69, 1
      %p73 = scmp.eq.s32.totalorder %s14, 1
      %p74 = scmp.ne.s32.totalorder %s69, %s71
      %p75 = scmp.eq.s32.totalorder %s14, 0
      %p76 = por %p74, %p75
      %p77 = scmp.ne.s32.totalorder %s69, %s71
      %p78 = scmp.eq.s32.totalorder %s19, 1
      %p79 = por %p77, %p78
      %p80 = scmp.ne.s32.totalorder %s71, %s72
      %p81 = scmp.eq.s32.totalorder %s19, 0
      %p82 = por %p80, %p81
      %p83 = scmp.ne.s32.totalorder %s71, %s72
      %p84 = scmp.eq.s32.totalorder %s20, 1
      %p85 = por %p83, %p84
      %p87 = scmp.ne.s32.totalorder %s72, %s86
      %p88 = scmp.eq.s32.totalorder %s20, 0
      %p89 = por %p87, %p88
      %s91 = sadd.s32 %s90, 1
      %p94 = scmp.eq.s32.totalorder %s14, 1
      %p95 = scmp.ne.s32.totalorder %s90, %s92
      %p96 = scmp.eq.s32.totalorder %s14, 0
      %p97 = por %p95, %p96
      %p98 = scmp.ne.s32.totalorder %s90, %s92
      %p99 = scmp.eq.s32.totalorder %s19, 1
      %p100 = por %p98, %p99
      %p101 = scmp.ne.s32.totalorder %s92, %s93
      %p102 = scmp.eq.s32.totalorder %s19, 0
      %p103 = por %p101, %p102
      %p104 = scmp.ne.s32.totalorder %s92, %s93
      %p105 = scmp.eq.s32.totalorder %s20, 1
      %p106 = por %p104, %p105
      %p108 = scmp.ne.s32.totalorder %s93, %s107
      %p109 = scmp.eq.s32.totalorder %s20, 0
      %p110 = por %p108, %p109
      %s112 = sadd.s32 %s111, 1
      %p115 = scmp.eq.s32.totalorder %s14, 1
      %p116 = scmp.ne.s32.totalorder %s111, %s113
      %p117 = scmp.eq.s32.totalorder %s14, 0
      %p118 = por %p116, %p117
      %p119 = scmp.ne.s32.totalorder %s111, %s113
      %p120 = scmp.eq.s32.totalorder %s19, 1
      %p121 = por %p119, %p120
      %p122 = scmp.ne.s32.totalorder %s113, %s114
      %p123 = scmp.eq.s32.totalorder %s19, 0
      %p124 = por %p122, %p123
      %p125 = scmp.ne.s32.totalorder %s113, %s114
      %p126 = scmp.eq.s32.totalorder %s20, 1
      %p127 = por %p125, %p126
      %p129 = scmp.ne.s32.totalorder %s114, %s128
      %p130 = scmp.eq.s32.totalorder %s20, 0
      %p131 = por %p129, %p130
      %s133 = sadd.s32 %s132, 1
      %p136 = scmp.eq.s32.totalorder %s14, 1
      %p137 = scmp.ne.s32.totalorder %s132, %s134
      %p138 = scmp.eq.s32.totalorder %s14, 0
      %p139 = por %p137, %p138
      %p140 = scmp.ne.s32.totalorder %s132, %s134
      %p141 = scmp.eq.s32.totalorder %s19, 1
      %p142 = por %p140, %p141
      %p143 = scmp.ne.s32.totalorder %s134, %s135
      %p144 = scmp.eq.s32.totalorder %s19, 0
      %p145 = por %p143, %p144
      %p146 = scmp.ne.s32.totalorder %s134, %s135
      %p147 = scmp.eq.s32.totalorder %s20, 1
      %p148 = por %p146, %p147
      %p150 = scmp.ne.s32.totalorder %s135, %s149
      %p151 = scmp.eq.s32.totalorder %s20, 0
      %p152 = por %p150, %p151
      %s154 = sadd.s32 %s153, 1
      %p157 = scmp.eq.s32.totalorder %s14, 1
      %p158 = scmp.ne.s32.totalorder %s153, %s155
      %p159 = scmp.eq.s32.totalorder %s14, 0
      %p160 = por %p158, %p159
      %p161 = scmp.ne.s32.totalorder %s153, %s155
      %p162 = scmp.eq.s32.totalorder %s19, 1
      %p163 = por %p161, %p162
      %p164 = scmp.ne.s32.totalorder %s155, %s156
      %p165 = scmp.eq.s32.totalorder %s19, 0
      %p166 = por %p164, %p165
      %p167 = scmp.ne.s32.totalorder %s155, %s156
      %p168 = scmp.eq.s32.totalorder %s20, 1
      %p169 = por %p167, %p168
      %p171 = scmp.ne.s32.totalorder %s156, %s170
      %p172 = scmp.eq.s32.totalorder %s20, 0
      %p173 = por %p171, %p172
      %s175 = sadd.s32 %s174, 1
      %p178 = scmp.eq.s32.totalorder %s14, 1
      %p179 = scmp.ne.s32.totalorder %s174, %s176
      %p180 = scmp.eq.s32.totalorder %s14, 0
      %p181 = por %p179, %p180
      %p182 = scmp.ne.s32.totalorder %s174, %s176
      %p183 = scmp.eq.s32.totalorder %s19, 1
      %p184 = por %p182, %p183
      %p185 = scmp.ne.s32.totalorder %s176, %s177
      %p186 = scmp.eq.s32.totalorder %s19, 0
      %p187 = por %p185, %p186
      %p188 = scmp.ne.s32.totalorder %s176, %s177
      %p189 = scmp.eq.s32.totalorder %s20, 1
      %p190 = por %p188, %p189
      %p192 = scmp.ne.s32.totalorder %s177, %s191
      %p193 = scmp.eq.s32.totalorder %s20, 0
      %p194 = por %p192, %p193
      %p195 = scmp.le.s32.totalorder 1, %s14
      %p196 = scmp.lt.s32.totalorder %s14, 3
      %p197 = pnand %p195, %p196
      %p198 = pneg %p197
      // Predicated region
      $region9: #{tpu_custom_call.1} parent=5 // pred_check
        _
      $region10: #{tpu_custom_call.1} parent=5 // pred_check_branch
        %200 = sbr.rel (%p197) target = $region12
      $region11: #{tpu_custom_call.1} parent=5 // pred_region
        %s201 = ssub.s32 %s14, 1
        // Predicated region
        $region13: #{tpu_custom_call.1} parent=11 // pred_check
          %p202 = pneg %p61
        $region14: #{tpu_custom_call.1} parent=11 // pred_check_branch
          %204 = sbr.rel (%p202) target = $region16
        $region15: #{tpu_custom_call.1} parent=11 // pred_region
          _
        $region16: #{tpu_custom_call.1} parent=11 // pred_fallthru
          _
        // Predicated region
        $region17: #{tpu_custom_call.1} parent=11 // pred_check
          %p205 = pneg %p82
        $region18: #{tpu_custom_call.1} parent=11 // pred_check_branch
          %207 = sbr.rel (%p205) target = $region20
        $region19: #{tpu_custom_call.1} parent=11 // pred_region
          _
        $region20: #{tpu_custom_call.1} parent=11 // pred_fallthru
          _
        // Predicated region
        $region21: #{tpu_custom_call.1} parent=11 // pred_check
          %p208 = pneg %p103
        $region22: #{tpu_custom_call.1} parent=11 // pred_check_branch
          %210 = sbr.rel (%p208) target = $region24
        $region23: #{tpu_custom_call.1} parent=11 // pred_region
          _
        $region24: #{tpu_custom_call.1} parent=11 // pred_fallthru
          _
        // Predicated region
        $region25: #{tpu_custom_call.1} parent=11 // pred_check
          %p211 = pneg %p124
        $region26: #{tpu_custom_call.1} parent=11 // pred_check_branch
          %213 = sbr.rel (%p211) target = $region28
        $region27: #{tpu_custom_call.1} parent=11 // pred_region
          _
        $region28: #{tpu_custom_call.1} parent=11 // pred_fallthru
          _
        // Predicated region
        $region29: #{tpu_custom_call.1} parent=11 // pred_check
          %p214 = pneg %p145
        $region30: #{tpu_custom_call.1} parent=11 // pred_check_branch
          %216 = sbr.rel (%p214) target = $region32
        $region31: #{tpu_custom_call.1} parent=11 // pred_region
          _
        $region32: #{tpu_custom_call.1} parent=11 // pred_fallthru
          _
        // Predicated region
        $region33: #{tpu_custom_call.1} parent=11 // pred_check
          %p217 = pneg %p166
        $region34: #{tpu_custom_call.1} parent=11 // pred_check_branch
          %219 = sbr.rel (%p217) target = $region36
        $region35: #{tpu_custom_call.1} parent=11 // pred_region
          _
        $region36: #{tpu_custom_call.1} parent=11 // pred_fallthru
          _
      $region12: #{tpu_custom_call.1} parent=5 // pred_fallthru
        _
      %p220 = scmp.lt.s32.totalorder %s14, 2
      // Predicated region
      $region37: #{tpu_custom_call.1} parent=5 // pred_check
        %p221 = pneg %p220
      $region38: #{tpu_custom_call.1} parent=5 // pred_check_branch
        %223 = sbr.rel (%p221) target = $region40
      $region39: #{tpu_custom_call.1} parent=5 // pred_region
        // Predicated region
        $region41: #{tpu_custom_call.1} parent=39 // pred_check
          %p224 = pneg %p34
        $region42: #{tpu_custom_call.1} parent=39 // pred_check_branch
          %226 = sbr.rel (%p224) target = $region44
        $region43: #{tpu_custom_call.1} parent=39 // pred_region
          %s227 = sand.u32 %s24, 1
          %s228 = sand.u32 %s24, 1
          %s229 = smul.addr %s228, 8
          %s230 = scalar_lea.vmem [#allocation3], %s229
          %s231 = smul.addr %s14, 4
          %s232 = scalar_lea.vmem %s0, %s231
          // Predicated region
          $region45: #{tpu_custom_call.1} parent=43 // pred_check
            _
          $region46: #{tpu_custom_call.1} parent=43 // pred_check_branch
            %234 = sbr.rel (0) target = $region48
          $region47: #{tpu_custom_call.1} parent=43 // pred_region
            // Predicated region
            $region49: #{tpu_custom_call.1} parent=47 // pred_check
              _
            $region50: #{tpu_custom_call.1} parent=47 // pred_check_branch
              %236 = sbr.rel target = $region52
            $region51: #{tpu_custom_call.1} parent=47 // pred_region
              // Predicated region
              $region64: #{tpu_custom_call.1} parent=51 // pred_check
                _
              $region65: #{tpu_custom_call.1} parent=51 // pred_check_branch
                %253 = sbr.rel (0) target = $region67
              $region66: #{tpu_custom_call.1} parent=51 // pred_region
                loop: start=0, step=1, limit=1
                $region68: #{tpu_custom_call.1} parent=66 // loop_pre_header
                  _
                $region69: #{tpu_custom_call.1} parent=66 // loop_header
                  %s255 = sphi 0, %s259
                  %p256 = scmp.ge.s32.totalorder %s255, 1
                  %s260 = sphi %s232, %s232
                  %s261 = sphi %s230, %s230
                $region70: #{tpu_custom_call.1} parent=66 // loop_header_branch
                  %258 = sbr.rel (%p256) target = $region74
                $region71: #{tpu_custom_call.1} parent=66 // loop_body
                  _
                $region72: #{tpu_custom_call.1} parent=66 // loop_footer
                  %s259 = sadd.s32 1, %s255
                $region73: #{tpu_custom_call.1} parent=66 // loop_footer_branch
                  %254 = sbr.rel target = $region69
                $region74: #{tpu_custom_call.1} parent=66 // loop_exit
                  _
                loop: start=0, step=1, limit=1
                $region75: #{tpu_custom_call.1} parent=66 // loop_pre_header
                  _
                $region76: #{tpu_custom_call.1} parent=66 // loop_header
                  %s264 = sphi 0, %s268
                  %p265 = scmp.ge.s32.totalorder %s264, 1
                  %s269 = sphi %s232, %s232
                  %s270 = sphi %s230, %s230
                $region77: #{tpu_custom_call.1} parent=66 // loop_header_branch
                  %267 = sbr.rel (%p265) target = $region81
                $region78: #{tpu_custom_call.1} parent=66 // loop_body
                  %v271 = vld [vmem:[%s269] sm:$0xf]
                  %272 = vst [vmem:[%s270] sm:$0xf] %v271
                  %v273 = vld [vmem:[%s269 + $0x8] sm:$0xf]
                  %274 = vst [vmem:[%s270 + $0x4] sm:$0xf] %v273
                $region79: #{tpu_custom_call.1} parent=66 // loop_footer
                  %s268 = sadd.s32 1, %s264
                $region80: #{tpu_custom_call.1} parent=66 // loop_footer_branch
                  %263 = sbr.rel target = $region76
                $region81: #{tpu_custom_call.1} parent=66 // loop_exit
                  _
              $region67: #{tpu_custom_call.1} parent=51 // pred_fallthru
                _
            $region52: #{tpu_custom_call.1} parent=47 // pred_fallthru
              _
            // Predicated region
            $region53: #{tpu_custom_call.1} parent=47 // pred_check
              _
            $region54: #{tpu_custom_call.1} parent=47 // pred_check_branch
              %238 = sbr.rel (0) target = $region56
            $region55: #{tpu_custom_call.1} parent=47 // pred_region
              loop: start=0, step=1, limit=1
              $region57: #{tpu_custom_call.1} parent=55 // loop_pre_header
                _
              $region58: #{tpu_custom_call.1} parent=55 // loop_header
                %s241 = sphi 0, %s245
                %p242 = scmp.ge.s32.totalorder %s241, 1
                %s246 = sphi %s232, %s232
                %s247 = sphi %s230, %s230
              $region59: #{tpu_custom_call.1} parent=55 // loop_header_branch
                %244 = sbr.rel (%p242) target = $region63
              $region60: #{tpu_custom_call.1} parent=55 // loop_body
                %v248 = vld [vmem:[%s246] sm:$0xf]
                %249 = vst [vmem:[%s247] sm:$0xf] %v248
                %v250 = vld [vmem:[%s246 + $0x8] sm:$0xf]
                %251 = vst [vmem:[%s247 + $0x4] sm:$0xf] %v250
              $region61: #{tpu_custom_call.1} parent=55 // loop_footer
                %s245 = sadd.s32 1, %s241
              $region62: #{tpu_custom_call.1} parent=55 // loop_footer_branch
                %240 = sbr.rel target = $region58
              $region63: #{tpu_custom_call.1} parent=55 // loop_exit
                _
            $region56: #{tpu_custom_call.1} parent=47 // pred_fallthru
              _
          $region48: #{tpu_custom_call.1} parent=43 // pred_fallthru
            _
          %275 = vnop
        $region44: #{tpu_custom_call.1} parent=39 // pred_fallthru
          _
      $region40: #{tpu_custom_call.1} parent=5 // pred_fallthru
        _
      %p276 = scmp.le.s32.totalorder 1, %s14
      %p277 = scmp.lt.s32.totalorder %s14, 3
      %p278 = pnand %p276, %p277
      %p279 = pneg %p278
      // Predicated region
      $region82: #{tpu_custom_call.1} parent=5 // pred_check
        _
      $region83: #{tpu_custom_call.1} parent=5 // pred_check_branch
        %281 = sbr.rel (%p278) target = $region85
      $region84: #{tpu_custom_call.1} parent=5 // pred_region
        %s282 = ssub.s32 %s14, 1
        %s283 = sand.u32 %s27, 1
        %s284 = sand.u32 %s27, 1
        %s285 = smul.addr %s284, 8
        %s286 = scalar_lea.vmem [#allocation3], %s285
        // Predicated region
        $region86: #{tpu_custom_call.1} parent=84 // pred_check
          %p287 = pneg %p40
        $region87: #{tpu_custom_call.1} parent=84 // pred_check_branch
          %289 = sbr.rel (%p287) target = $region89
        $region88: #{tpu_custom_call.1} parent=84 // pred_region
          _
        $region89: #{tpu_custom_call.1} parent=84 // pred_fallthru
          _
        %s290 = sand.u32 %s27, 1
        %s291 = sand.u32 %s27, 1
        %s292 = smul.addr %s291, 8
        %s293 = scalar_lea.vmem [#allocation3], %s292
        %p294 = pneg %p40
        %p295 = pneg %p37
        %p296 = pneg %p61
        %p297 = pneg %p58
        %p298 = pneg %p82
        %p299 = pneg %p79
        %p300 = pneg %p103
        %p301 = pneg %p100
        %p302 = pneg %p124
        %p303 = pneg %p121
        %p304 = pneg %p145
        %p305 = pneg %p142
        %p306 = pneg %p166
        %p307 = pneg %p163
        %p308 = pneg %p187
        %p309 = pneg %p184
        %p311 = scmp.eq.s32.totalorder %s19, 0
        // Predicated region
        $region90: #{tpu_custom_call.1} parent=84 // pred_check
          %p312 = pneg %p311
        $region91: #{tpu_custom_call.1} parent=84 // pred_check_branch
          %314 = sbr.rel (%p312) target = $region93
        $region92: #{tpu_custom_call.1} parent=84 // pred_region
          %vm315 = vcmask 17408
          %316 = vst.msk [vmem:[#allocation2] sm:$0x3] %vm315, 0.0
        $region93: #{tpu_custom_call.1} parent=84 // pred_fallthru
          _
        %v317 = vld [vmem:[#allocation2] sm:$0x3]
        %v318 = vld [vmem:[%s286] sm:$0x7]
        %v319 = vld [vmem:[%s286 + $0x4] sm:$0x7]
        %vm320 = vcmask 1042432
        %v321 = vsel %vm320, %v318, 0.0
        %322 = vadd.xlane.f32.xlu0 %v321
        %v323 = vpop.xlane.xlu0 %322
        %v324 = vsel %vm320, %v319, 0.0
        %325 = vadd.xlane.f32.xlu0 %v324
        %v326 = vpop.xlane.xlu0 %325
        %v329 = vlaneseq
        %v330 = vand.u32 %v329, 127
        %v331 = vlaneseq
        %v332 = vshrl.u32 %v331, 7
        %v333 = vsub.s32 %v330, %v332
        %v334 = vrot.slane %v323, %v333
        %v335 = vlaneseq
        %v336 = vshrl.u32 %v335, 7
        %v337 = vsub.s32 %v330, %v336
        %v338 = vrot.slane %v326, %v337
        %vm339 = vcmask 1041409
        %v340 = vsel %vm339, %v338, %v334
        %v342 = vadd.f32 %v317, %v340
        %vm343 = vcmask 17408
        %344 = vst.msk [vmem:[#allocation2] sm:$0x3] %vm343, %v342
        %p345 = scmp.eq.s32.totalorder %s19, 1
        // Predicated region
        $region94: #{tpu_custom_call.1} parent=84 // pred_check
          %p346 = pneg %p345
        $region95: #{tpu_custom_call.1} parent=84 // pred_check_branch
          %348 = sbr.rel (%p346) target = $region97
        $region96: #{tpu_custom_call.1} parent=84 // pred_region
          %v349 = vld [vmem:[#allocation2] sm:$0x3]
          %v350 = vmul.f32 %v349, 0.00390625
          %v351 = vld [vmem:[%s1] sm:$0x7]
          %v352 = vld [vmem:[%s2] sm:$0x1]
          %v354 = vlaneseq
          %v355 = vshrl.u32 %v354, 7
          %v356 = vsub.s32 0, %v355
          %v357 = vrot.slane %v352, %v356
          %vm359 = vcmask 23552
          %v361 = vsel %vm359, %v350, 0
          %v364 = vsel %vm320, %v351, 0
          %366 = vmatprep.subr.mxu0 0.0
          %367 = vmatpush1.msra.mxu0 %v364
          %368 = vmatprep.subr.mxu0 0.0
          %369 = vmatpush1.msra.mxu0 0.0
          %370 = vmatprep.subr.mxu0 0.0
          %371 = vmatpush1.msra.mxu0 0.0
          %372 = vmatprep.subr.mxu0 0.0
          %373 = vmatpush1.msra.mxu0 0.0
          %374 = vmatprep.subr.mxu0 0.0
          %375 = vmatpush1.msra.mxu0 0.0
          %376 = vmatprep.subr.mxu0 0.0
          %377 = vmatpush1.msra.mxu0 0.0
          %378 = vmatprep.subr.mxu0 0.0
          %379 = vmatpush1.msra.mxu0 0.0
          %380 = vmatprep.subr.mxu0 0.0
          %381 = vmatpush1.msra.mxu0 0.0
          %382 = vmatprep.subr.mxu0 0.0
          %383 = vmatpush1.msra.mxu0 0.0
          %384 = vmatprep.subr.mxu0 0.0
          %385 = vmatpush1.msra.mxu0 0.0
          %386 = vmatprep.subr.mxu0 0.0
          %387 = vmatpush1.msra.mxu0 0.0
          %388 = vmatprep.subr.mxu0 0.0
          %389 = vmatpush1.msra.mxu0 0.0
          %390 = vmatprep.subr.mxu0 0.0
          %391 = vmatpush1.msra.mxu0 0.0
          %392 = vmatprep.subr.mxu0 0.0
          %393 = vmatpush1.msra.mxu0 0.0
          %394 = vmatprep.subr.mxu0 0.0
          %395 = vmatpush1.msra.mxu0 0.0
          %396 = vmatprep.subr.mxu0 0.0
          %397 = vmatpush1.msra.mxu0 0.0
          %398 = vmatprep.subr.mxu0 0.0
          %399 = vmatpush1.msra.mxu0 0.0
          %400 = vmatprep.subr.mxu0 0.0
          %401 = vmatpush1.msra.mxu0 0.0
          %402 = vmatprep.subr.mxu0 0.0
          %403 = vmatpush1.msra.mxu0 0.0
          %404 = vmatprep.subr.mxu0 0.0
          %405 = vmatpush1.msra.mxu0 0.0
          %406 = vmatprep.subr.mxu0 0.0
          %407 = vmatpush1.msra.mxu0 0.0
          %408 = vmatprep.subr.mxu0 0.0
          %409 = vmatpush1.msra.mxu0 0.0
          %410 = vmatprep.subr.mxu0 0.0
          %411 = vmatpush1.msra.mxu0 0.0
          %412 = vmatprep.subr.mxu0 0.0
          %413 = vmatpush1.msra.mxu0 0.0
          %414 = vmatprep.subr.mxu0 0.0
          %415 = vmatpush1.msra.mxu0 0.0
          %416 = vmatprep.subr.mxu0 0.0
          %417 = vmatpush1.msra.mxu0 0.0
          %418 = vmatprep.subr.mxu0 0.0
          %419 = vmatpush1.msra.mxu0 0.0
          %420 = vmatprep.subr.mxu0 0.0
          %421 = vmatpush1.msra.mxu0 0.0
          %422 = vmatprep.subr.mxu0 0.0
          %423 = vmatpush1.msra.mxu0 0.0
          %424 = vmatprep.subr.mxu0 0.0
          %425 = vmatpush1.msra.mxu0 0.0
          %426 = vmatprep.subr.mxu0 0.0
          %427 = vmatpush1.msra.mxu0 0.0
          %428 = vmatprep.subr.mxu0 0.0
          %429 = vmatpush1.msra.mxu0 0.0
          %430 = vmatprep.mubr.f32.mxu0 0.0
          %431 = vmatmul.mubr.f32.gmra.mrb[0].mxu0 %v361
          %v432 = vpop.f32.mrb[0].mxu0
          %v433 = vadd.f32 %v357, %v432
          %v434 = vpop.f32.mrb[0].mxu0
          %435 = vdwg.mxu0
          %v436 = vpack.c.bf16 %v433, %v433
          %v437 = vld [vmem:[%s3] sm:$0xff]
          %v438 = vld [vmem:[%s3 + $0x8] sm:$0xff]
          %v439 = vld [vmem:[%s3 + $0x10] sm:$0xff]
          %v440 = vld [vmem:[%s3 + $0x18] sm:$0xff]
          %v441 = vld [vmem:[%s3 + $0x20] sm:$0xff]
          %v442 = vld [vmem:[%s3 + $0x28] sm:$0xff]
          %v443 = vld [vmem:[%s3 + $0x30] sm:$0xff]
          %v444 = vld [vmem:[%s3 + $0x38] sm:$0xff]
          %v445 = vld [vmem:[%s3 + $0x40] sm:$0xff]
          %v446 = vld [vmem:[%s3 + $0x48] sm:$0xff]
          %v447 = vld [vmem:[%s3 + $0x50] sm:$0xff]
          %v448 = vld [vmem:[%s3 + $0x58] sm:$0xff]
          %v449 = vld [vmem:[%s3 + $0x60] sm:$0xff]
          %v450 = vld [vmem:[%s3 + $0x68] sm:$0xff]
          %v451 = vld [vmem:[%s3 + $0x70] sm:$0xff]
          %v452 = vld [vmem:[%s3 + $0x78] sm:$0xff]
          %v453 = vld [vmem:[%s3 + $0x80] sm:$0xff]
          %v454 = vld [vmem:[%s3 + $0x88] sm:$0xff]
          %v455 = vld [vmem:[%s3 + $0x90] sm:$0xff]
          %v456 = vld [vmem:[%s3 + $0x98] sm:$0xff]
          %v457 = vld [vmem:[%s3 + $0xa0] sm:$0xff]
          %v458 = vld [vmem:[%s3 + $0xa8] sm:$0xff]
          %v459 = vld [vmem:[%s3 + $0xb0] sm:$0xff]
          %v460 = vld [vmem:[%s3 + $0xb8] sm:$0xff]
          %v461 = vld [vmem:[%s3 + $0xc0] sm:$0xff]
          %v462 = vld [vmem:[%s3 + $0xc8] sm:$0xff]
          %v463 = vld [vmem:[%s3 + $0xd0] sm:$0xff]
          %v464 = vld [vmem:[%s3 + $0xd8] sm:$0xff]
          %v465 = vld [vmem:[%s3 + $0xe0] sm:$0xff]
          %v466 = vld [vmem:[%s3 + $0xe8] sm:$0xff]
          %v467 = vld [vmem:[%s3 + $0xf0] sm:$0xff]
          %v468 = vld [vmem:[%s3 + $0xf8] sm:$0xff]
          %v469 = vld [vmem:[%s4] sm:$0xff]
          %v470 = vld [vmem:[%s4 + $0x8] sm:$0xff]
          %v473 = vlaneseq
          %v474 = vshrl.u32 %v473, 7
          %v475 = vsub.s32 0, %v474
          %v476 = vrot.slane %v469, %v475
          %v477 = vlaneseq
          %v478 = vshrl.u32 %v477, 7
          %v479 = vsub.s32 1, %v478
          %v480 = vrot.slane %v469, %v479
          %v481 = vlaneseq
          %v482 = vshrl.u32 %v481, 7
          %v483 = vsub.s32 2, %v482
          %v484 = vrot.slane %v469, %v483
          %v485 = vlaneseq
          %v486 = vshrl.u32 %v485, 7
          %v487 = vsub.s32 3, %v486
          %v488 = vrot.slane %v469, %v487
          %v489 = vlaneseq
          %v490 = vshrl.u32 %v489, 7
          %v491 = vsub.s32 4, %v490
          %v492 = vrot.slane %v469, %v491
          %v493 = vlaneseq
          %v494 = vshrl.u32 %v493, 7
          %v495 = vsub.s32 5, %v494
          %v496 = vrot.slane %v469, %v495
          %v497 = vlaneseq
          %v498 = vshrl.u32 %v497, 7
          %v499 = vsub.s32 6, %v498
          %v500 = vrot.slane %v469, %v499
          %v501 = vlaneseq
          %v502 = vshrl.u32 %v501, 7
          %v503 = vsub.s32 7, %v502
          %v504 = vrot.slane %v469, %v503
          %v505 = vlaneseq
          %v506 = vshrl.u32 %v505, 7
          %v507 = vsub.s32 0, %v506
          %v508 = vrot.slane %v470, %v507
          %v509 = vlaneseq
          %v510 = vshrl.u32 %v509, 7
          %v511 = vsub.s32 1, %v510
          %v512 = vrot.slane %v470, %v511
          %v513 = vlaneseq
          %v514 = vshrl.u32 %v513, 7
          %v515 = vsub.s32 2, %v514
          %v516 = vrot.slane %v470, %v515
          %v517 = vlaneseq
          %v518 = vshrl.u32 %v517, 7
          %v519 = vsub.s32 3, %v518
          %v520 = vrot.slane %v470, %v519
          %v521 = vlaneseq
          %v522 = vshrl.u32 %v521, 7
          %v523 = vsub.s32 4, %v522
          %v524 = vrot.slane %v470, %v523
          %v525 = vlaneseq
          %v526 = vshrl.u32 %v525, 7
          %v527 = vsub.s32 5, %v526
          %v528 = vrot.slane %v470, %v527
          %v529 = vlaneseq
          %v530 = vshrl.u32 %v529, 7
          %v531 = vsub.s32 6, %v530
          %v532 = vrot.slane %v470, %v531
          %v533 = vlaneseq
          %v534 = vshrl.u32 %v533, 7
          %v535 = vsub.s32 7, %v534
          %v536 = vrot.slane %v470, %v535
          %v585 = vunpack.c.l.b16 %v437
          %v586 = vunpack.c.h.b16 %v437
          %v587 = vunpack.c.l.b16 %v438
          %v588 = vunpack.c.h.b16 %v438
          %v589 = vunpack.c.l.b16 %v439
          %v590 = vunpack.c.h.b16 %v439
          %v591 = vunpack.c.l.b16 %v440
          %v592 = vunpack.c.h.b16 %v440
          %v593 = vunpack.c.l.b16 %v441
          %v594 = vunpack.c.h.b16 %v441
          %v595 = vunpack.c.l.b16 %v442
          %v596 = vunpack.c.h.b16 %v442
          %v597 = vunpack.c.l.b16 %v443
          %v598 = vunpack.c.h.b16 %v443
          %v599 = vunpack.c.l.b16 %v444
          %v600 = vunpack.c.h.b16 %v444
          %v601 = vunpack.c.l.b16 %v445
          %v602 = vunpack.c.h.b16 %v445
          %v603 = vunpack.c.l.b16 %v446
          %v604 = vunpack.c.h.b16 %v446
          %v605 = vunpack.c.l.b16 %v447
          %v606 = vunpack.c.h.b16 %v447
          %v607 = vunpack.c.l.b16 %v448
          %v608 = vunpack.c.h.b16 %v448
          %v609 = vunpack.c.l.b16 %v449
          %v610 = vunpack.c.h.b16 %v449
          %v611 = vunpack.c.l.b16 %v450
          %v612 = vunpack.c.h.b16 %v450
          %v613 = vunpack.c.l.b16 %v451
          %v614 = vunpack.c.h.b16 %v451
          %v615 = vunpack.c.l.b16 %v452
          %v616 = vunpack.c.h.b16 %v452
          %v617 = vunpack.c.l.b16 %v453
          %v618 = vunpack.c.h.b16 %v453
          %v619 = vunpack.c.l.b16 %v454
          %v620 = vunpack.c.h.b16 %v454
          %v621 = vunpack.c.l.b16 %v455
          %v622 = vunpack.c.h.b16 %v455
          %v623 = vunpack.c.l.b16 %v456
          %v624 = vunpack.c.h.b16 %v456
          %v625 = vunpack.c.l.b16 %v457
          %v626 = vunpack.c.h.b16 %v457
          %v627 = vunpack.c.l.b16 %v458
          %v628 = vunpack.c.h.b16 %v458
          %v629 = vunpack.c.l.b16 %v459
          %v630 = vunpack.c.h.b16 %v459
          %v631 = vunpack.c.l.b16 %v460
          %v632 = vunpack.c.h.b16 %v460
          %v633 = vunpack.c.l.b16 %v461
          %v634 = vunpack.c.h.b16 %v461
          %v635 = vunpack.c.l.b16 %v462
          %v636 = vunpack.c.h.b16 %v462
          %v637 = vunpack.c.l.b16 %v463
          %v638 = vunpack.c.h.b16 %v463
          %v639 = vunpack.c.l.b16 %v464
          %v640 = vunpack.c.h.b16 %v464
          %v641 = vunpack.c.l.b16 %v465
          %v642 = vunpack.c.h.b16 %v465
          %v643 = vunpack.c.l.b16 %v466
          %v644 = vunpack.c.h.b16 %v466
          %v645 = vunpack.c.l.b16 %v467
          %v646 = vunpack.c.h.b16 %v467
          %v647 = vunpack.c.l.b16 %v468
          %v648 = vunpack.c.h.b16 %v468
          %v649 = vpack.c.b16 %v601, %v585
          %v650 = vpack.c.b16 %v602, %v586
          %v651 = vpack.c.b16 %v603, %v587
          %v652 = vpack.c.b16 %v604, %v588
          %v653 = vpack.c.b16 %v605, %v589
          %v654 = vpack.c.b16 %v606, %v590
          %v655 = vpack.c.b16 %v607, %v591
          %v656 = vpack.c.b16 %v608, %v592
          %v657 = vpack.c.b16 %v609, %v593
          %v658 = vpack.c.b16 %v610, %v594
          %v659 = vpack.c.b16 %v611, %v595
          %v660 = vpack.c.b16 %v612, %v596
          %v661 = vpack.c.b16 %v613, %v597
          %v662 = vpack.c.b16 %v614, %v598
          %v663 = vpack.c.b16 %v615, %v599
          %v664 = vpack.c.b16 %v616, %v600
          %v665 = vpack.c.b16 %v633, %v617
          %v666 = vpack.c.b16 %v634, %v618
          %v667 = vpack.c.b16 %v635, %v619
          %v668 = vpack.c.b16 %v636, %v620
          %v669 = vpack.c.b16 %v637, %v621
          %v670 = vpack.c.b16 %v638, %v622
          %v671 = vpack.c.b16 %v639, %v623
          %v672 = vpack.c.b16 %v640, %v624
          %v673 = vpack.c.b16 %v641, %v625
          %v674 = vpack.c.b16 %v642, %v626
          %v675 = vpack.c.b16 %v643, %v627
          %v676 = vpack.c.b16 %v644, %v628
          %v677 = vpack.c.b16 %v645, %v629
          %v678 = vpack.c.b16 %v646, %v630
          %v679 = vpack.c.b16 %v647, %v631
          %v680 = vpack.c.b16 %v648, %v632
          %vm713 = vcmask 261120
          %v715 = vsel %vm713, %v436, 0
          %717 = vmatprep.subr.bf16.mxu0 %v650
          %718 = vmatpush1.bf16.msra.mxu0 %v649
          %719 = vmatprep.subr.bf16.mxu0 %v666
          %720 = vmatpush1.bf16.msra.mxu0 %v665
          %721 = vmatprep.subr.bf16.mxu0 0
          %722 = vmatpush1.bf16.msra.mxu0 0
          %723 = vmatprep.subr.bf16.mxu0 0
          %724 = vmatpush1.bf16.msra.mxu0 0
          %725 = vmatprep.subr.bf16.mxu0 0
          %726 = vmatpush1.bf16.msra.mxu0 0
          %727 = vmatprep.subr.bf16.mxu0 0
          %728 = vmatpush1.bf16.msra.mxu0 0
          %729 = vmatprep.subr.bf16.mxu0 0
          %730 = vmatpush1.bf16.msra.mxu0 0
          %731 = vmatprep.subr.bf16.mxu0 0
          %732 = vmatpush1.bf16.msra.mxu0 0
          %733 = vmatprep.subr.bf16.mxu0 0
          %734 = vmatpush1.bf16.msra.mxu0 0
          %735 = vmatprep.subr.bf16.mxu0 0
          %736 = vmatpush1.bf16.msra.mxu0 0
          %737 = vmatprep.subr.bf16.mxu0 0
          %738 = vmatpush1.bf16.msra.mxu0 0
          %739 = vmatprep.subr.bf16.mxu0 0
          %740 = vmatpush1.bf16.msra.mxu0 0
          %741 = vmatprep.subr.bf16.mxu0 0
          %742 = vmatpush1.bf16.msra.mxu0 0
          %743 = vmatprep.subr.bf16.mxu0 0
          %744 = vmatpush1.bf16.msra.mxu0 0
          %745 = vmatprep.subr.bf16.mxu0 0
          %746 = vmatpush1.bf16.msra.mxu0 0
          %747 = vmatprep.subr.bf16.mxu0 0
          %748 = vmatpush1.bf16.msra.mxu0 0
          %749 = vmatprep.mubr.bf16.mxu0 0
          %750 = vmatmul.mubr.bf16.gmra.mrb[0].mxu0 %v715
          %v751 = vpop.f32.mrb[0].mxu0
          %v752 = vadd.f32 %v476, %v751
          %v753 = vpop.f32.mrb[0].mxu0
          %v754 = vadd.f32 %v480, %v753
          %v755 = vpop.f32.mrb[0].mxu0
          %v756 = vpop.f32.mrb[0].mxu0
          %757 = vdwg.mxu0
          %758 = vmatprep.subr.bf16.mxu0 %v652
          %759 = vmatpush1.bf16.msra.mxu0 %v651
          %760 = vmatprep.subr.bf16.mxu0 %v668
          %761 = vmatpush1.bf16.msra.mxu0 %v667
          %762 = vmatprep.subr.bf16.mxu0 0
          %763 = vmatpush1.bf16.msra.mxu0 0
          %764 = vmatprep.subr.bf16.mxu0 0
          %765 = vmatpush1.bf16.msra.mxu0 0
          %766 = vmatprep.subr.bf16.mxu0 0
          %767 = vmatpush1.bf16.msra.mxu0 0
          %768 = vmatprep.subr.bf16.mxu0 0
          %769 = vmatpush1.bf16.msra.mxu0 0
          %770 = vmatprep.subr.bf16.mxu0 0
          %771 = vmatpush1.bf16.msra.mxu0 0
          %772 = vmatprep.subr.bf16.mxu0 0
          %773 = vmatpush1.bf16.msra.mxu0 0
          %774 = vmatprep.subr.bf16.mxu0 0
          %775 = vmatpush1.bf16.msra.mxu0 0
          %776 = vmatprep.subr.bf16.mxu0 0
          %777 = vmatpush1.bf16.msra.mxu0 0
          %778 = vmatprep.subr.bf16.mxu0 0
          %779 = vmatpush1.bf16.msra.mxu0 0
          %780 = vmatprep.subr.bf16.mxu0 0
          %781 = vmatpush1.bf16.msra.mxu0 0
          %782 = vmatprep.subr.bf16.mxu0 0
          %783 = vmatpush1.bf16.msra.mxu0 0
          %784 = vmatprep.subr.bf16.mxu0 0
          %785 = vmatpush1.bf16.msra.mxu0 0
          %786 = vmatprep.subr.bf16.mxu0 0
          %787 = vmatpush1.bf16.msra.mxu0 0
          %788 = vmatprep.subr.bf16.mxu0 0
          %789 = vmatpush1.bf16.msra.mxu0 0
          %790 = vmatprep.mubr.bf16.mxu0 0
          %791 = vmatmul.mubr.bf16.gmra.mrb[0].mxu0 %v715
          %v792 = vpop.f32.mrb[0].mxu0
          %v793 = vadd.f32 %v484, %v792
          %v794 = vpop.f32.mrb[0].mxu0
          %v795 = vadd.f32 %v488, %v794
          %v796 = vpop.f32.mrb[0].mxu0
          %v797 = vpop.f32.mrb[0].mxu0
          %798 = vdwg.mxu0
          %799 = vmatprep.subr.bf16.mxu0 %v654
          %800 = vmatpush1.bf16.msra.mxu0 %v653
          %801 = vmatprep.subr.bf16.mxu0 %v670
          %802 = vmatpush1.bf16.msra.mxu0 %v669
          %803 = vmatprep.subr.bf16.mxu0 0
          %804 = vmatpush1.bf16.msra.mxu0 0
          %805 = vmatprep.subr.bf16.mxu0 0
          %806 = vmatpush1.bf16.msra.mxu0 0
          %807 = vmatprep.subr.bf16.mxu0 0
          %808 = vmatpush1.bf16.msra.mxu0 0
          %809 = vmatprep.subr.bf16.mxu0 0
          %810 = vmatpush1.bf16.msra.mxu0 0
          %811 = vmatprep.subr.bf16.mxu0 0
          %812 = vmatpush1.bf16.msra.mxu0 0
          %813 = vmatprep.subr.bf16.mxu0 0
          %814 = vmatpush1.bf16.msra.mxu0 0
          %815 = vmatprep.subr.bf16.mxu0 0
          %816 = vmatpush1.bf16.msra.mxu0 0
          %817 = vmatprep.subr.bf16.mxu0 0
          %818 = vmatpush1.bf16.msra.mxu0 0
          %819 = vmatprep.subr.bf16.mxu0 0
          %820 = vmatpush1.bf16.msra.mxu0 0
          %821 = vmatprep.subr.bf16.mxu0 0
          %822 = vmatpush1.bf16.msra.mxu0 0
          %823 = vmatprep.subr.bf16.mxu0 0
          %824 = vmatpush1.bf16.msra.mxu0 0
          %825 = vmatprep.subr.bf16.mxu0 0
          %826 = vmatpush1.bf16.msra.mxu0 0
          %827 = vmatprep.subr.bf16.mxu0 0
          %828 = vmatpush1.bf16.msra.mxu0 0
          %829 = vmatprep.subr.bf16.mxu0 0
          %830 = vmatpush1.bf16.msra.mxu0 0
          %831 = vmatprep.mubr.bf16.mxu0 0
          %832 = vmatmul.mubr.bf16.gmra.mrb[0].mxu0 %v715
          %v833 = vpop.f32.mrb[0].mxu0
          %v834 = vadd.f32 %v492, %v833
          %v835 = vpop.f32.mrb[0].mxu0
          %v836 = vadd.f32 %v496, %v835
          %v837 = vpop.f32.mrb[0].mxu0
          %v838 = vpop.f32.mrb[0].mxu0
          %839 = vdwg.mxu0
          %840 = vmatprep.subr.bf16.mxu0 %v656
          %841 = vmatpush1.bf16.msra.mxu0 %v655
          %842 = vmatprep.subr.bf16.mxu0 %v672
          %843 = vmatpush1.bf16.msra.mxu0 %v671
          %844 = vmatprep.subr.bf16.mxu0 0
          %845 = vmatpush1.bf16.msra.mxu0 0
          %846 = vmatprep.subr.bf16.mxu0 0
          %847 = vmatpush1.bf16.msra.mxu0 0
          %848 = vmatprep.subr.bf16.mxu0 0
          %849 = vmatpush1.bf16.msra.mxu0 0
          %850 = vmatprep.subr.bf16.mxu0 0
          %851 = vmatpush1.bf16.msra.mxu0 0
          %852 = vmatprep.subr.bf16.mxu0 0
          %853 = vmatpush1.bf16.msra.mxu0 0
          %854 = vmatprep.subr.bf16.mxu0 0
          %855 = vmatpush1.bf16.msra.mxu0 0
          %856 = vmatprep.subr.bf16.mxu0 0
          %857 = vmatpush1.bf16.msra.mxu0 0
          %858 = vmatprep.subr.bf16.mxu0 0
          %859 = vmatpush1.bf16.msra.mxu0 0
          %860 = vmatprep.subr.bf16.mxu0 0
          %861 = vmatpush1.bf16.msra.mxu0 0
          %862 = vmatprep.subr.bf16.mxu0 0
          %863 = vmatpush1.bf16.msra.mxu0 0
          %864 = vmatprep.subr.bf16.mxu0 0
          %865 = vmatpush1.bf16.msra.mxu0 0
          %866 = vmatprep.subr.bf16.mxu0 0
          %867 = vmatpush1.bf16.msra.mxu0 0
          %868 = vmatprep.subr.bf16.mxu0 0
          %869 = vmatpush1.bf16.msra.mxu0 0
          %870 = vmatprep.subr.bf16.mxu0 0
          %871 = vmatpush1.bf16.msra.mxu0 0
          %872 = vmatprep.mubr.bf16.mxu0 0
          %873 = vmatmul.mubr.bf16.gmra.mrb[0].mxu0 %v715
          %v874 = vpop.f32.mrb[0].mxu0
          %v875 = vadd.f32 %v500, %v874
          %v876 = vpop.f32.mrb[0].mxu0
          %v877 = vadd.f32 %v504, %v876
          %v878 = vpop.f32.mrb[0].mxu0
          %v879 = vpop.f32.mrb[0].mxu0
          %880 = vdwg.mxu0
          %881 = vmatprep.subr.bf16.mxu0 %v658
          %882 = vmatpush1.bf16.msra.mxu0 %v657
          %883 = vmatprep.subr.bf16.mxu0 %v674
          %884 = vmatpush1.bf16.msra.mxu0 %v673
          %885 = vmatprep.subr.bf16.mxu0 0
          %886 = vmatpush1.bf16.msra.mxu0 0
          %887 = vmatprep.subr.bf16.mxu0 0
          %888 = vmatpush1.bf16.msra.mxu0 0
          %889 = vmatprep.subr.bf16.mxu0 0
          %890 = vmatpush1.bf16.msra.mxu0 0
          %891 = vmatprep.subr.bf16.mxu0 0
          %892 = vmatpush1.bf16.msra.mxu0 0
          %893 = vmatprep.subr.bf16.mxu0 0
          %894 = vmatpush1.bf16.msra.mxu0 0
          %895 = vmatprep.subr.bf16.mxu0 0
          %896 = vmatpush1.bf16.msra.mxu0 0
          %897 = vmatprep.subr.bf16.mxu0 0
          %898 = vmatpush1.bf16.msra.mxu0 0
          %899 = vmatprep.subr.bf16.mxu0 0
          %900 = vmatpush1.bf16.msra.mxu0 0
          %901 = vmatprep.subr.bf16.mxu0 0
          %902 = vmatpush1.bf16.msra.mxu0 0
          %903 = vmatprep.subr.bf16.mxu0 0
          %904 = vmatpush1.bf16.msra.mxu0 0
          %905 = vmatprep.subr.bf16.mxu0 0
          %906 = vmatpush1.bf16.msra.mxu0 0
          %907 = vmatprep.subr.bf16.mxu0 0
          %908 = vmatpush1.bf16.msra.mxu0 0
          %909 = vmatprep.subr.bf16.mxu0 0
          %910 = vmatpush1.bf16.msra.mxu0 0
          %911 = vmatprep.subr.bf16.mxu0 0
          %912 = vmatpush1.bf16.msra.mxu0 0
          %913 = vmatprep.mubr.bf16.mxu0 0
          %914 = vmatmul.mubr.bf16.gmra.mrb[0].mxu0 %v715
          %v915 = vpop.f32.mrb[0].mxu0
          %v916 = vadd.f32 %v508, %v915
          %v917 = vpop.f32.mrb[0].mxu0
          %v918 = vadd.f32 %v512, %v917
          %v919 = vpop.f32.mrb[0].mxu0
          %v920 = vpop.f32.mrb[0].mxu0
          %921 = vdwg.mxu0
          %922 = vmatprep.subr.bf16.mxu0 %v660
          %923 = vmatpush1.bf16.msra.mxu0 %v659
          %924 = vmatprep.subr.bf16.mxu0 %v676
          %925 = vmatpush1.bf16.msra.mxu0 %v675
          %926 = vmatprep.subr.bf16.mxu0 0
          %927 = vmatpush1.bf16.msra.mxu0 0
          %928 = vmatprep.subr.bf16.mxu0 0
          %929 = vmatpush1.bf16.msra.mxu0 0
          %930 = vmatprep.subr.bf16.mxu0 0
          %931 = vmatpush1.bf16.msra.mxu0 0
          %932 = vmatprep.subr.bf16.mxu0 0
          %933 = vmatpush1.bf16.msra.mxu0 0
          %934 = vmatprep.subr.bf16.mxu0 0
          %935 = vmatpush1.bf16.msra.mxu0 0
          %936 = vmatprep.subr.bf16.mxu0 0
          %937 = vmatpush1.bf16.msra.mxu0 0
          %938 = vmatprep.subr.bf16.mxu0 0
          %939 = vmatpush1.bf16.msra.mxu0 0
          %940 = vmatprep.subr.bf16.mxu0 0
          %941 = vmatpush1.bf16.msra.mxu0 0
          %942 = vmatprep.subr.bf16.mxu0 0
          %943 = vmatpush1.bf16.msra.mxu0 0
          %944 = vmatprep.subr.bf16.mxu0 0
          %945 = vmatpush1.bf16.msra.mxu0 0
          %946 = vmatprep.subr.bf16.mxu0 0
          %947 = vmatpush1.bf16.msra.mxu0 0
          %948 = vmatprep.subr.bf16.mxu0 0
          %949 = vmatpush1.bf16.msra.mxu0 0
          %950 = vmatprep.subr.bf16.mxu0 0
          %951 = vmatpush1.bf16.msra.mxu0 0
          %952 = vmatprep.subr.bf16.mxu0 0
          %953 = vmatpush1.bf16.msra.mxu0 0
          %954 = vmatprep.mubr.bf16.mxu0 0
          %955 = vmatmul.mubr.bf16.gmra.mrb[0].mxu0 %v715
          %v956 = vpop.f32.mrb[0].mxu0
          %v957 = vadd.f32 %v516, %v956
          %v958 = vpop.f32.mrb[0].mxu0
          %v959 = vadd.f32 %v520, %v958
          %v960 = vpop.f32.mrb[0].mxu0
          %v961 = vpop.f32.mrb[0].mxu0
          %962 = vdwg.mxu0
          %963 = vmatprep.subr.bf16.mxu0 %v662
          %964 = vmatpush1.bf16.msra.mxu0 %v661
          %965 = vmatprep.subr.bf16.mxu0 %v678
          %966 = vmatpush1.bf16.msra.mxu0 %v677
          %967 = vmatprep.subr.bf16.mxu0 0
          %968 = vmatpush1.bf16.msra.mxu0 0
          %969 = vmatprep.subr.bf16.mxu0 0
          %970 = vmatpush1.bf16.msra.mxu0 0
          %971 = vmatprep.subr.bf16.mxu0 0
          %972 = vmatpush1.bf16.msra.mxu0 0
          %973 = vmatprep.subr.bf16.mxu0 0
          %974 = vmatpush1.bf16.msra.mxu0 0
          %975 = vmatprep.subr.bf16.mxu0 0
          %976 = vmatpush1.bf16.msra.mxu0 0
          %977 = vmatprep.subr.bf16.mxu0 0
          %978 = vmatpush1.bf16.msra.mxu0 0
          %979 = vmatprep.subr.bf16.mxu0 0
          %980 = vmatpush1.bf16.msra.mxu0 0
          %981 = vmatprep.subr.bf16.mxu0 0
          %982 = vmatpush1.bf16.msra.mxu0 0
          %983 = vmatprep.subr.bf16.mxu0 0
          %984 = vmatpush1.bf16.msra.mxu0 0
          %985 = vmatprep.subr.bf16.mxu0 0
          %986 = vmatpush1.bf16.msra.mxu0 0
          %987 = vmatprep.subr.bf16.mxu0 0
          %988 = vmatpush1.bf16.msra.mxu0 0
          %989 = vmatprep.subr.bf16.mxu0 0
          %990 = vmatpush1.bf16.msra.mxu0 0
          %991 = vmatprep.subr.bf16.mxu0 0
          %992 = vmatpush1.bf16.msra.mxu0 0
          %993 = vmatprep.subr.bf16.mxu0 0
          %994 = vmatpush1.bf16.msra.mxu0 0
          %995 = vmatprep.mubr.bf16.mxu0 0
          %996 = vmatmul.mubr.bf16.gmra.mrb[0].mxu0 %v715
          %v997 = vpop.f32.mrb[0].mxu0
          %v998 = vadd.f32 %v524, %v997
          %v999 = vpop.f32.mrb[0].mxu0
          %v1000 = vadd.f32 %v528, %v999
          %v1001 = vpop.f32.mrb[0].mxu0
          %v1002 = vpop.f32.mrb[0].mxu0
          %1003 = vdwg.mxu0
          %1004 = vmatprep.subr.bf16.mxu0 %v664
          %1005 = vmatpush1.bf16.msra.mxu0 %v663
          %1006 = vmatprep.subr.bf16.mxu0 %v680
          %1007 = vmatpush1.bf16.msra.mxu0 %v679
          %1008 = vmatprep.subr.bf16.mxu0 0
          %1009 = vmatpush1.bf16.msra.mxu0 0
          %1010 = vmatprep.subr.bf16.mxu0 0
          %1011 = vmatpush1.bf16.msra.mxu0 0
          %1012 = vmatprep.subr.bf16.mxu0 0
          %1013 = vmatpush1.bf16.msra.mxu0 0
          %1014 = vmatprep.subr.bf16.mxu0 0
          %1015 = vmatpush1.bf16.msra.mxu0 0
          %1016 = vmatprep.subr.bf16.mxu0 0
          %1017 = vmatpush1.bf16.msra.mxu0 0
          %1018 = vmatprep.subr.bf16.mxu0 0
          %1019 = vmatpush1.bf16.msra.mxu0 0
          %1020 = vmatprep.subr.bf16.mxu0 0
          %1021 = vmatpush1.bf16.msra.mxu0 0
          %1022 = vmatprep.subr.bf16.mxu0 0
          %1023 = vmatpush1.bf16.msra.mxu0 0
          %1024 = vmatprep.subr.bf16.mxu0 0
          %1025 = vmatpush1.bf16.msra.mxu0 0
          %1026 = vmatprep.subr.bf16.mxu0 0
          %1027 = vmatpush1.bf16.msra.mxu0 0
          %1028 = vmatprep.subr.bf16.mxu0 0
          %1029 = vmatpush1.bf16.msra.mxu0 0
          %1030 = vmatprep.subr.bf16.mxu0 0
          %1031 = vmatpush1.bf16.msra.mxu0 0
          %1032 = vmatprep.subr.bf16.mxu0 0
          %1033 = vmatpush1.bf16.msra.mxu0 0
          %1034 = vmatprep.subr.bf16.mxu0 0
          %1035 = vmatpush1.bf16.msra.mxu0 0
          %1036 = vmatprep.mubr.bf16.mxu0 0
          %1037 = vmatmul.mubr.bf16.gmra.mrb[0].mxu0 %v715
          %v1038 = vpop.f32.mrb[0].mxu0
          %v1039 = vadd.f32 %v532, %v1038
          %v1040 = vpop.f32.mrb[0].mxu0
          %v1041 = vadd.f32 %v536, %v1040
          %v1042 = vpop.f32.mrb[0].mxu0
          %v1043 = vpop.f32.mrb[0].mxu0
          %1044 = vdwg.mxu0
          %vm1045 = vcmp.gt.f32.partialorder %v752, 20.0
          %vm1046 = vcmp.gt.f32.partialorder %v754, 20.0
          %vm1047 = vcmp.gt.f32.partialorder %v793, 20.0
          %vm1048 = vcmp.gt.f32.partialorder %v795, 20.0
          %vm1049 = vcmp.gt.f32.partialorder %v834, 20.0
          %vm1050 = vcmp.gt.f32.partialorder %v836, 20.0
          %vm1051 = vcmp.gt.f32.partialorder %v875, 20.0
          %vm1052 = vcmp.gt.f32.partialorder %v877, 20.0
          %vm1053 = vcmp.gt.f32.partialorder %v916, 20.0
          %vm1054 = vcmp.gt.f32.partialorder %v918, 20.0
          %vm1055 = vcmp.gt.f32.partialorder %v957, 20.0
          %vm1056 = vcmp.gt.f32.partialorder %v959, 20.0
          %vm1057 = vcmp.gt.f32.partialorder %v998, 20.0
          %vm1058 = vcmp.gt.f32.partialorder %v1000, 20.0
          %vm1059 = vcmp.gt.f32.partialorder %v1039, 20.0
          %vm1060 = vcmp.gt.f32.partialorder %v1041, 20.0
          %v1061 = vmin.f32 %v752, 20.0
          %v1062 = vmin.f32 %v754, 20.0
          %v1063 = vmin.f32 %v793, 20.0
          %v1064 = vmin.f32 %v795, 20.0
          %v1065 = vmin.f32 %v834, 20.0
          %v1066 = vmin.f32 %v836, 20.0
          %v1067 = vmin.f32 %v875, 20.0
          %v1068 = vmin.f32 %v877, 20.0
          %v1069 = vmin.f32 %v916, 20.0
          %v1070 = vmin.f32 %v918, 20.0
          %v1071 = vmin.f32 %v957, 20.0
          %v1072 = vmin.f32 %v959, 20.0
          %v1073 = vmin.f32 %v998, 20.0
          %v1074 = vmin.f32 %v1000, 20.0
          %v1075 = vmin.f32 %v1039, 20.0
          %v1076 = vmin.f32 %v1041, 20.0
          %v1077 = vmul.f32 %v1061, 1.442695
          %v1078 = vpow.pop %v1077
          %v1079 = vmul.f32 %v1062, 1.442695
          %v1080 = vpow.pop %v1079
          %v1081 = vmul.f32 %v1063, 1.442695
          %v1082 = vpow.pop %v1081
          %v1083 = vmul.f32 %v1064, 1.442695
          %v1084 = vpow.pop %v1083
          %v1085 = vmul.f32 %v1065, 1.442695
          %v1086 = vpow.pop %v1085
          %v1087 = vmul.f32 %v1066, 1.442695
          %v1088 = vpow.pop %v1087
          %v1089 = vmul.f32 %v1067, 1.442695
          %v1090 = vpow.pop %v1089
          %v1091 = vmul.f32 %v1068, 1.442695
          %v1092 = vpow.pop %v1091
          %v1093 = vmul.f32 %v1069, 1.442695
          %v1094 = vpow.pop %v1093
          %v1095 = vmul.f32 %v1070, 1.442695
          %v1096 = vpow.pop %v1095
          %v1097 = vmul.f32 %v1071, 1.442695
          %v1098 = vpow.pop %v1097
          %v1099 = vmul.f32 %v1072, 1.442695
          %v1100 = vpow.pop %v1099
          %v1101 = vmul.f32 %v1073, 1.442695
          %v1102 = vpow.pop %v1101
          %v1103 = vmul.f32 %v1074, 1.442695
          %v1104 = vpow.pop %v1103
          %v1105 = vmul.f32 %v1075, 1.442695
          %v1106 = vpow.pop %v1105
          %v1107 = vmul.f32 %v1076, 1.442695
          %v1108 = vpow.pop %v1107
          %v1109 = vadd.f32 %v1078, 1.0
          %v1110 = vlog2.pop %v1109
          %v1111 = vmul.f32 %v1110, 0.6931472
          %v1112 = vmul.f32 -0.5, %v1078
          %v1113 = vadd.f32 %v1112, 1.0
          %v1114 = vmul.f32 %v1113, %v1078
          %v1115 = vand.u32 2147483647, %v1078
          %vm1116 = vcmp.lt.f32.partialorder %v1115, 0.0004427343
          %v1117 = vsel %vm1116, %v1114, %v1111
          %v1118 = vadd.f32 %v1080, 1.0
          %v1119 = vlog2.pop %v1118
          %v1120 = vmul.f32 %v1119, 0.6931472
          %v1121 = vmul.f32 -0.5, %v1080
          %v1122 = vadd.f32 %v1121, 1.0
          %v1123 = vmul.f32 %v1122, %v1080
          %v1124 = vand.u32 2147483647, %v1080
          %vm1125 = vcmp.lt.f32.partialorder %v1124, 0.0004427343
          %v1126 = vsel %vm1125, %v1123, %v1120
          %v1127 = vadd.f32 %v1082, 1.0
          %v1128 = vlog2.pop %v1127
          %v1129 = vmul.f32 %v1128, 0.6931472
          %v1130 = vmul.f32 -0.5, %v1082
          %v1131 = vadd.f32 %v1130, 1.0
          %v1132 = vmul.f32 %v1131, %v1082
          %v1133 = vand.u32 2147483647, %v1082
          %vm1134 = vcmp.lt.f32.partialorder %v1133, 0.0004427343
          %v1135 = vsel %vm1134, %v1132, %v1129
          %v1136 = vadd.f32 %v1084, 1.0
          %v1137 = vlog2.pop %v1136
          %v1138 = vmul.f32 %v1137, 0.6931472
          %v1139 = vmul.f32 -0.5, %v1084
          %v1140 = vadd.f32 %v1139, 1.0
          %v1141 = vmul.f32 %v1140, %v1084
          %v1142 = vand.u32 2147483647, %v1084
          %vm1143 = vcmp.lt.f32.partialorder %v1142, 0.0004427343
          %v1144 = vsel %vm1143, %v1141, %v1138
          %v1145 = vadd.f32 %v1086, 1.0
          %v1146 = vlog2.pop %v1145
          %v1147 = vmul.f32 %v1146, 0.6931472
          %v1148 = vmul.f32 -0.5, %v1086
          %v1149 = vadd.f32 %v1148, 1.0
          %v1150 = vmul.f32 %v1149, %v1086
          %v1151 = vand.u32 2147483647, %v1086
          %vm1152 = vcmp.lt.f32.partialorder %v1151, 0.0004427343
          %v1153 = vsel %vm1152, %v1150, %v1147
          %v1154 = vadd.f32 %v1088, 1.0
          %v1155 = vlog2.pop %v1154
          %v1156 = vmul.f32 %v1155, 0.6931472
          %v1157 = vmul.f32 -0.5, %v1088
          %v1158 = vadd.f32 %v1157, 1.0
          %v1159 = vmul.f32 %v1158, %v1088
          %v1160 = vand.u32 2147483647, %v1088
          %vm1161 = vcmp.lt.f32.partialorder %v1160, 0.0004427343
          %v1162 = vsel %vm1161, %v1159, %v1156
          %v1163 = vadd.f32 %v1090, 1.0
          %v1164 = vlog2.pop %v1163
          %v1165 = vmul.f32 %v1164, 0.6931472
          %v1166 = vmul.f32 -0.5, %v1090
          %v1167 = vadd.f32 %v1166, 1.0
          %v1168 = vmul.f32 %v1167, %v1090
          %v1169 = vand.u32 2147483647, %v1090
          %vm1170 = vcmp.lt.f32.partialorder %v1169, 0.0004427343
          %v1171 = vsel %vm1170, %v1168, %v1165
          %v1172 = vadd.f32 %v1092, 1.0
          %v1173 = vlog2.pop %v1172
          %v1174 = vmul.f32 %v1173, 0.6931472
          %v1175 = vmul.f32 -0.5, %v1092
          %v1176 = vadd.f32 %v1175, 1.0
          %v1177 = vmul.f32 %v1176, %v1092
          %v1178 = vand.u32 2147483647, %v1092
          %vm1179 = vcmp.lt.f32.partialorder %v1178, 0.0004427343
          %v1180 = vsel %vm1179, %v1177, %v1174
          %v1181 = vadd.f32 %v1094, 1.0
          %v1182 = vlog2.pop %v1181
          %v1183 = vmul.f32 %v1182, 0.6931472
          %v1184 = vmul.f32 -0.5, %v1094
          %v1185 = vadd.f32 %v1184, 1.0
          %v1186 = vmul.f32 %v1185, %v1094
          %v1187 = vand.u32 2147483647, %v1094
          %vm1188 = vcmp.lt.f32.partialorder %v1187, 0.0004427343
          %v1189 = vsel %vm1188, %v1186, %v1183
          %v1190 = vadd.f32 %v1096, 1.0
          %v1191 = vlog2.pop %v1190
          %v1192 = vmul.f32 %v1191, 0.6931472
          %v1193 = vmul.f32 -0.5, %v1096
          %v1194 = vadd.f32 %v1193, 1.0
          %v1195 = vmul.f32 %v1194, %v1096
          %v1196 = vand.u32 2147483647, %v1096
          %vm1197 = vcmp.lt.f32.partialorder %v1196, 0.0004427343
          %v1198 = vsel %vm1197, %v1195, %v1192
          %v1199 = vadd.f32 %v1098, 1.0
          %v1200 = vlog2.pop %v1199
          %v1201 = vmul.f32 %v1200, 0.6931472
          %v1202 = vmul.f32 -0.5, %v1098
          %v1203 = vadd.f32 %v1202, 1.0
          %v1204 = vmul.f32 %v1203, %v1098
          %v1205 = vand.u32 2147483647, %v1098
          %vm1206 = vcmp.lt.f32.partialorder %v1205, 0.0004427343
          %v1207 = vsel %vm1206, %v1204, %v1201
          %v1208 = vadd.f32 %v1100, 1.0
          %v1209 = vlog2.pop %v1208
          %v1210 = vmul.f32 %v1209, 0.6931472
          %v1211 = vmul.f32 -0.5, %v1100
          %v1212 = vadd.f32 %v1211, 1.0
          %v1213 = vmul.f32 %v1212, %v1100
          %v1214 = vand.u32 2147483647, %v1100
          %vm1215 = vcmp.lt.f32.partialorder %v1214, 0.0004427343
          %v1216 = vsel %vm1215, %v1213, %v1210
          %v1217 = vadd.f32 %v1102, 1.0
          %v1218 = vlog2.pop %v1217
          %v1219 = vmul.f32 %v1218, 0.6931472
          %v1220 = vmul.f32 -0.5, %v1102
          %v1221 = vadd.f32 %v1220, 1.0
          %v1222 = vmul.f32 %v1221, %v1102
          %v1223 = vand.u32 2147483647, %v1102
          %vm1224 = vcmp.lt.f32.partialorder %v1223, 0.0004427343
          %v1225 = vsel %vm1224, %v1222, %v1219
          %v1226 = vadd.f32 %v1104, 1.0
          %v1227 = vlog2.pop %v1226
          %v1228 = vmul.f32 %v1227, 0.6931472
          %v1229 = vmul.f32 -0.5, %v1104
          %v1230 = vadd.f32 %v1229, 1.0
          %v1231 = vmul.f32 %v1230, %v1104
          %v1232 = vand.u32 2147483647, %v1104
          %vm1233 = vcmp.lt.f32.partialorder %v1232, 0.0004427343
          %v1234 = vsel %vm1233, %v1231, %v1228
          %v1235 = vadd.f32 %v1106, 1.0
          %v1236 = vlog2.pop %v1235
          %v1237 = vmul.f32 %v1236, 0.6931472
          %v1238 = vmul.f32 -0.5, %v1106
          %v1239 = vadd.f32 %v1238, 1.0
          %v1240 = vmul.f32 %v1239, %v1106
          %v1241 = vand.u32 2147483647, %v1106
          %vm1242 = vcmp.lt.f32.partialorder %v1241, 0.0004427343
          %v1243 = vsel %vm1242, %v1240, %v1237
          %v1244 = vadd.f32 %v1108, 1.0
          %v1245 = vlog2.pop %v1244
          %v1246 = vmul.f32 %v1245, 0.6931472
          %v1247 = vmul.f32 -0.5, %v1108
          %v1248 = vadd.f32 %v1247, 1.0
          %v1249 = vmul.f32 %v1248, %v1108
          %v1250 = vand.u32 2147483647, %v1108
          %vm1251 = vcmp.lt.f32.partialorder %v1250, 0.0004427343
          %v1252 = vsel %vm1251, %v1249, %v1246
          %v1253 = vsel %vm1045, %v752, %v1117
          %v1254 = vsel %vm1046, %v754, %v1126
          %v1255 = vsel %vm1047, %v793, %v1135
          %v1256 = vsel %vm1048, %v795, %v1144
          %v1257 = vsel %vm1049, %v834, %v1153
          %v1258 = vsel %vm1050, %v836, %v1162
          %v1259 = vsel %vm1051, %v875, %v1171
          %v1260 = vsel %vm1052, %v877, %v1180
          %v1261 = vsel %vm1053, %v916, %v1189
          %v1262 = vsel %vm1054, %v918, %v1198
          %v1263 = vsel %vm1055, %v957, %v1207
          %v1264 = vsel %vm1056, %v959, %v1216
          %v1265 = vsel %vm1057, %v998, %v1225
          %v1266 = vsel %vm1058, %v1000, %v1234
          %v1267 = vsel %vm1059, %v1039, %v1243
          %v1268 = vsel %vm1060, %v1041, %v1252
          %v1269 = vtanh.pop %v1253
          %v1270 = vtanh.pop %v1254
          %v1271 = vtanh.pop %v1255
          %v1272 = vtanh.pop %v1256
          %v1273 = vtanh.pop %v1257
          %v1274 = vtanh.pop %v1258
          %v1275 = vtanh.pop %v1259
          %v1276 = vtanh.pop %v1260
          %v1277 = vtanh.pop %v1261
          %v1278 = vtanh.pop %v1262
          %v1279 = vtanh.pop %v1263
          %v1280 = vtanh.pop %v1264
          %v1281 = vtanh.pop %v1265
          %v1282 = vtanh.pop %v1266
          %v1283 = vtanh.pop %v1267
          %v1284 = vtanh.pop %v1268
          %v1285 = vmul.f32 %v752, %v1269
          %v1286 = vmul.f32 %v754, %v1270
          %v1287 = vmul.f32 %v793, %v1271
          %v1288 = vmul.f32 %v795, %v1272
          %v1289 = vmul.f32 %v834, %v1273
          %v1290 = vmul.f32 %v836, %v1274
          %v1291 = vmul.f32 %v875, %v1275
          %v1292 = vmul.f32 %v877, %v1276
          %v1293 = vmul.f32 %v916, %v1277
          %v1294 = vmul.f32 %v918, %v1278
          %v1295 = vmul.f32 %v957, %v1279
          %v1296 = vmul.f32 %v959, %v1280
          %v1297 = vmul.f32 %v998, %v1281
          %v1298 = vmul.f32 %v1000, %v1282
          %v1299 = vmul.f32 %v1039, %v1283
          %v1300 = vmul.f32 %v1041, %v1284
          %v1301 = vpack.c.bf16 %v1285, %v1285
          %v1302 = vpack.c.bf16 %v1286, %v1286
          %v1303 = vpack.c.bf16 %v1287, %v1287
          %v1304 = vpack.c.bf16 %v1288, %v1288
          %v1305 = vpack.c.bf16 %v1289, %v1289
          %v1306 = vpack.c.bf16 %v1290, %v1290
          %v1307 = vpack.c.bf16 %v1291, %v1291
          %v1308 = vpack.c.bf16 %v1292, %v1292
          %v1309 = vpack.c.bf16 %v1293, %v1293
          %v1310 = vpack.c.bf16 %v1294, %v1294
          %v1311 = vpack.c.bf16 %v1295, %v1295
          %v1312 = vpack.c.bf16 %v1296, %v1296
          %v1313 = vpack.c.bf16 %v1297, %v1297
          %v1314 = vpack.c.bf16 %v1298, %v1298
          %v1315 = vpack.c.bf16 %v1299, %v1299
          %v1316 = vpack.c.bf16 %v1300, %v1300
          %v1317 = vld [vmem:[%s5] sm:$0xf]
          %v1318 = vld [vmem:[%s5 + $0x4] sm:$0xf]
          %v1319 = vld [vmem:[%s5 + $0x8] sm:$0xf]
          %v1320 = vld [vmem:[%s5 + $0xc] sm:$0xf]
          %v1321 = vld [vmem:[%s5 + $0x10] sm:$0xf]
          %v1322 = vld [vmem:[%s5 + $0x14] sm:$0xf]
          %v1323 = vld [vmem:[%s5 + $0x18] sm:$0xf]
          %v1324 = vld [vmem:[%s5 + $0x1c] sm:$0xf]
          %v1325 = vld [vmem:[%s5 + $0x20] sm:$0xf]
          %v1326 = vld [vmem:[%s5 + $0x24] sm:$0xf]
          %v1327 = vld [vmem:[%s5 + $0x28] sm:$0xf]
          %v1328 = vld [vmem:[%s5 + $0x2c] sm:$0xf]
          %v1329 = vld [vmem:[%s5 + $0x30] sm:$0xf]
          %v1330 = vld [vmem:[%s5 + $0x34] sm:$0xf]
          %v1331 = vld [vmem:[%s5 + $0x38] sm:$0xf]
          %v1332 = vld [vmem:[%s5 + $0x3c] sm:$0xf]
          %v1333 = vld [vmem:[%s5 + $0x40] sm:$0xf]
          %v1334 = vld [vmem:[%s5 + $0x44] sm:$0xf]
          %v1335 = vld [vmem:[%s5 + $0x48] sm:$0xf]
          %v1336 = vld [vmem:[%s5 + $0x4c] sm:$0xf]
          %v1337 = vld [vmem:[%s5 + $0x50] sm:$0xf]
          %v1338 = vld [vmem:[%s5 + $0x54] sm:$0xf]
          %v1339 = vld [vmem:[%s5 + $0x58] sm:$0xf]
          %v1340 = vld [vmem:[%s5 + $0x5c] sm:$0xf]
          %v1341 = vld [vmem:[%s5 + $0x60] sm:$0xf]
          %v1342 = vld [vmem:[%s5 + $0x64] sm:$0xf]
          %v1343 = vld [vmem:[%s5 + $0x68] sm:$0xf]
          %v1344 = vld [vmem:[%s5 + $0x6c] sm:$0xf]
          %v1345 = vld [vmem:[%s5 + $0x70] sm:$0xf]
          %v1346 = vld [vmem:[%s5 + $0x74] sm:$0xf]
          %v1347 = vld [vmem:[%s5 + $0x78] sm:$0xf]
          %v1348 = vld [vmem:[%s5 + $0x7c] sm:$0xf]
          %v1349 = vld [vmem:[%s5 + $0x80] sm:$0xf]
          %v1350 = vld [vmem:[%s5 + $0x84] sm:$0xf]
          %v1351 = vld [vmem:[%s5 + $0x88] sm:$0xf]
          %v1352 = vld [vmem:[%s5 + $0x8c] sm:$0xf]
          %v1353 = vld [vmem:[%s5 + $0x90] sm:$0xf]
          %v1354 = vld [vmem:[%s5 + $0x94] sm:$0xf]
          %v1355 = vld [vmem:[%s5 + $0x98] sm:$0xf]
          %v1356 = vld [vmem:[%s5 + $0x9c] sm:$0xf]
          %v1357 = vld [vmem:[%s5 + $0xa0] sm:$0xf]
          %v1358 = vld [vmem:[%s5 + $0xa4] sm:$0xf]
          %v1359 = vld [vmem:[%s5 + $0xa8] sm:$0xf]
          %v1360 = vld [vmem:[%s5 + $0xac] sm:$0xf]
          %v1361 = vld [vmem:[%s5 + $0xb0] sm:$0xf]
          %v1362 = vld [vmem:[%s5 + $0xb4] sm:$0xf]
          %v1363 = vld [vmem:[%s5 + $0xb8] sm:$0xf]
          %v1364 = vld [vmem:[%s5 + $0xbc] sm:$0xf]
          %v1365 = vld [vmem:[%s5 + $0xc0] sm:$0xf]
          %v1366 = vld [vmem:[%s5 + $0xc4] sm:$0xf]
          %v1367 = vld [vmem:[%s5 + $0xc8] sm:$0xf]
          %v1368 = vld [vmem:[%s5 + $0xcc] sm:$0xf]
          %v1369 = vld [vmem:[%s5 + $0xd0] sm:$0xf]
          %v1370 = vld [vmem:[%s5 + $0xd4] sm:$0xf]
          %v1371 = vld [vmem:[%s5 + $0xd8] sm:$0xf]
          %v1372 = vld [vmem:[%s5 + $0xdc] sm:$0xf]
          %v1373 = vld [vmem:[%s5 + $0xe0] sm:$0xf]
          %v1374 = vld [vmem:[%s5 + $0xe4] sm:$0xf]
          %v1375 = vld [vmem:[%s5 + $0xe8] sm:$0xf]
          %v1376 = vld [vmem:[%s5 + $0xec] sm:$0xf]
          %v1377 = vld [vmem:[%s5 + $0xf0] sm:$0xf]
          %v1378 = vld [vmem:[%s5 + $0xf4] sm:$0xf]
          %v1379 = vld [vmem:[%s5 + $0xf8] sm:$0xf]
          %v1380 = vld [vmem:[%s5 + $0xfc] sm:$0xf]
          %v1381 = vld [vmem:[%s5 + $0x100] sm:$0xf]
          %v1382 = vld [vmem:[%s5 + $0x104] sm:$0xf]
          %v1383 = vld [vmem:[%s5 + $0x108] sm:$0xf]
          %v1384 = vld [vmem:[%s5 + $0x10c] sm:$0xf]
          %v1385 = vld [vmem:[%s5 + $0x110] sm:$0xf]
          %v1386 = vld [vmem:[%s5 + $0x114] sm:$0xf]
          %v1387 = vld [vmem:[%s5 + $0x118] sm:$0xf]
          %v1388 = vld [vmem:[%s5 + $0x11c] sm:$0xf]
          %v1389 = vld [vmem:[%s5 + $0x120] sm:$0xf]
          %v1390 = vld [vmem:[%s5 + $0x124] sm:$0xf]
          %v1391 = vld [vmem:[%s5 + $0x128] sm:$0xf]
          %v1392 = vld [vmem:[%s5 + $0x12c] sm:$0xf]
          %v1393 = vld [vmem:[%s5 + $0x130] sm:$0xf]
          %v1394 = vld [vmem:[%s5 + $0x134] sm:$0xf]
          %v1395 = vld [vmem:[%s5 + $0x138] sm:$0xf]
          %v1396 = vld [vmem:[%s5 + $0x13c] sm:$0xf]
          %v1397 = vld [vmem:[%s5 + $0x140] sm:$0xf]
          %v1398 = vld [vmem:[%s5 + $0x144] sm:$0xf]
          %v1399 = vld [vmem:[%s5 + $0x148] sm:$0xf]
          %v1400 = vld [vmem:[%s5 + $0x14c] sm:$0xf]
          %v1401 = vld [vmem:[%s5 + $0x150] sm:$0xf]
          %v1402 = vld [vmem:[%s5 + $0x154] sm:$0xf]
          %v1403 = vld [vmem:[%s5 + $0x158] sm:$0xf]
          %v1404 = vld [vmem:[%s5 + $0x15c] sm:$0xf]
          %v1405 = vld [vmem:[%s5 + $0x160] sm:$0xf]
          %v1406 = vld [vmem:[%s5 + $0x164] sm:$0xf]
          %v1407 = vld [vmem:[%s5 + $0x168] sm:$0xf]
          %v1408 = vld [vmem:[%s5 + $0x16c] sm:$0xf]
          %v1409 = vld [vmem:[%s5 + $0x170] sm:$0xf]
          %v1410 = vld [vmem:[%s5 + $0x174] sm:$0xf]
          %v1411 = vld [vmem:[%s5 + $0x178] sm:$0xf]
          %v1412 = vld [vmem:[%s5 + $0x17c] sm:$0xf]
          %v1413 = vld [vmem:[%s5 + $0x180] sm:$0xf]
          %v1414 = vld [vmem:[%s5 + $0x184] sm:$0xf]
          %v1415 = vld [vmem:[%s5 + $0x188] sm:$0xf]
          %v1416 = vld [vmem:[%s5 + $0x18c] sm:$0xf]
          %v1417 = vld [vmem:[%s5 + $0x190] sm:$0xf]
          %v1418 = vld [vmem:[%s5 + $0x194] sm:$0xf]
          %v1419 = vld [vmem:[%s5 + $0x198] sm:$0xf]
          %v1420 = vld [vmem:[%s5 + $0x19c] sm:$0xf]
          %v1421 = vld [vmem:[%s5 + $0x1a0] sm:$0xf]
          %v1422 = vld [vmem:[%s5 + $0x1a4] sm:$0xf]
          %v1423 = vld [vmem:[%s5 + $0x1a8] sm:$0xf]
          %v1424 = vld [vmem:[%s5 + $0x1ac] sm:$0xf]
          %v1425 = vld [vmem:[%s5 + $0x1b0] sm:$0xf]
          %v1426 = vld [vmem:[%s5 + $0x1b4] sm:$0xf]
          %v1427 = vld [vmem:[%s5 + $0x1b8] sm:$0xf]
          %v1428 = vld [vmem:[%s5 + $0x1bc] sm:$0xf]
          %v1429 = vld [vmem:[%s5 + $0x1c0] sm:$0xf]
          %v1430 = vld [vmem:[%s5 + $0x1c4] sm:$0xf]
          %v1431 = vld [vmem:[%s5 + $0x1c8] sm:$0xf]
          %v1432 = vld [vmem:[%s5 + $0x1cc] sm:$0xf]
          %v1433 = vld [vmem:[%s5 + $0x1d0] sm:$0xf]
          %v1434 = vld [vmem:[%s5 + $0x1d4] sm:$0xf]
          %v1435 = vld [vmem:[%s5 + $0x1d8] sm:$0xf]
          %v1436 = vld [vmem:[%s5 + $0x1dc] sm:$0xf]
          %v1437 = vld [vmem:[%s5 + $0x1e0] sm:$0xf]
          %v1438 = vld [vmem:[%s5 + $0x1e4] sm:$0xf]
          %v1439 = vld [vmem:[%s5 + $0x1e8] sm:$0xf]
          %v1440 = vld [vmem:[%s5 + $0x1ec] sm:$0xf]
          %v1441 = vld [vmem:[%s5 + $0x1f0] sm:$0xf]
          %v1442 = vld [vmem:[%s5 + $0x1f4] sm:$0xf]
          %v1443 = vld [vmem:[%s5 + $0x1f8] sm:$0xf]
          %v1444 = vld [vmem:[%s5 + $0x1fc] sm:$0xf]
          %v1445 = vld [vmem:[%s5 + $0x200] sm:$0xf]
          %v1446 = vld [vmem:[%s5 + $0x204] sm:$0xf]
          %v1447 = vld [vmem:[%s5 + $0x208] sm:$0xf]
          %v1448 = vld [vmem:[%s5 + $0x20c] sm:$0xf]
          %v1449 = vld [vmem:[%s5 + $0x210] sm:$0xf]
          %v1450 = vld [vmem:[%s5 + $0x214] sm:$0xf]
          %v1451 = vld [vmem:[%s5 + $0x218] sm:$0xf]
          %v1452 = vld [vmem:[%s5 + $0x21c] sm:$0xf]
          %v1453 = vld [vmem:[%s5 + $0x220] sm:$0xf]
          %v1454 = vld [vmem:[%s5 + $0x224] sm:$0xf]
          %v1455 = vld [vmem:[%s5 + $0x228] sm:$0xf]
          %v1456 = vld [vmem:[%s5 + $0x22c] sm:$0xf]
          %v1457 = vld [vmem:[%s5 + $0x230] sm:$0xf]
          %v1458 = vld [vmem:[%s5 + $0x234] sm:$0xf]
          %v1459 = vld [vmem:[%s5 + $0x238] sm:$0xf]
          %v1460 = vld [vmem:[%s5 + $0x23c] sm:$0xf]
          %v1461 = vld [vmem:[%s5 + $0x240] sm:$0xf]
          %v1462 = vld [vmem:[%s5 + $0x244] sm:$0xf]
          %v1463 = vld [vmem:[%s5 + $0x248] sm:$0xf]
          %v1464 = vld [vmem:[%s5 + $0x24c] sm:$0xf]
          %v1465 = vld [vmem:[%s5 + $0x250] sm:$0xf]
          %v1466 = vld [vmem:[%s5 + $0x254] sm:$0xf]
          %v1467 = vld [vmem:[%s5 + $0x258] sm:$0xf]
          %v1468 = vld [vmem:[%s5 + $0x25c] sm:$0xf]
          %v1469 = vld [vmem:[%s5 + $0x260] sm:$0xf]
          %v1470 = vld [vmem:[%s5 + $0x264] sm:$0xf]
          %v1471 = vld [vmem:[%s5 + $0x268] sm:$0xf]
          %v1472 = vld [vmem:[%s5 + $0x26c] sm:$0xf]
          %v1473 = vld [vmem:[%s5 + $0x270] sm:$0xf]
          %v1474 = vld [vmem:[%s5 + $0x274] sm:$0xf]
          %v1475 = vld [vmem:[%s5 + $0x278] sm:$0xf]
          %v1476 = vld [vmem:[%s5 + $0x27c] sm:$0xf]
          %v1477 = vld [vmem:[%s5 + $0x280] sm:$0xf]
          %v1478 = vld [vmem:[%s5 + $0x284] sm:$0xf]
          %v1479 = vld [vmem:[%s5 + $0x288] sm:$0xf]
          %v1480 = vld [vmem:[%s5 + $0x28c] sm:$0xf]
          %v1481 = vld [vmem:[%s5 + $0x290] sm:$0xf]
          %v1482 = vld [vmem:[%s5 + $0x294] sm:$0xf]
          %v1483 = vld [vmem:[%s5 + $0x298] sm:$0xf]
          %v1484 = vld [vmem:[%s5 + $0x29c] sm:$0xf]
          %v1485 = vld [vmem:[%s5 + $0x2a0] sm:$0xf]
          %v1486 = vld [vmem:[%s5 + $0x2a4] sm:$0xf]
          %v1487 = vld [vmem:[%s5 + $0x2a8] sm:$0xf]
          %v1488 = vld [vmem:[%s5 + $0x2ac] sm:$0xf]
          %v1489 = vld [vmem:[%s5 + $0x2b0] sm:$0xf]
          %v1490 = vld [vmem:[%s5 + $0x2b4] sm:$0xf]
          %v1491 = vld [vmem:[%s5 + $0x2b8] sm:$0xf]
          %v1492 = vld [vmem:[%s5 + $0x2bc] sm:$0xf]
          %v1493 = vld [vmem:[%s5 + $0x2c0] sm:$0xf]
          %v1494 = vld [vmem:[%s5 + $0x2c4] sm:$0xf]
          %v1495 = vld [vmem:[%s5 + $0x2c8] sm:$0xf]
          %v1496 = vld [vmem:[%s5 + $0x2cc] sm:$0xf]
          %v1497 = vld [vmem:[%s5 + $0x2d0] sm:$0xf]
          %v1498 = vld [vmem:[%s5 + $0x2d4] sm:$0xf]
          %v1499 = vld [vmem:[%s5 + $0x2d8] sm:$0xf]
          %v1500 = vld [vmem:[%s5 + $0x2dc] sm:$0xf]
          %v1501 = vld [vmem:[%s5 + $0x2e0] sm:$0xf]
          %v1502 = vld [vmem:[%s5 + $0x2e4] sm:$0xf]
          %v1503 = vld [vmem:[%s5 + $0x2e8] sm:$0xf]
          %v1504 = vld [vmem:[%s5 + $0x2ec] sm:$0xf]
          %v1505 = vld [vmem:[%s5 + $0x2f0] sm:$0xf]
          %v1506 = vld [vmem:[%s5 + $0x2f4] sm:$0xf]
          %v1507 = vld [vmem:[%s5 + $0x2f8] sm:$0xf]
          %v1508 = vld [vmem:[%s5 + $0x2fc] sm:$0xf]
          %v1509 = vld [vmem:[%s5 + $0x300] sm:$0xf]
          %v1510 = vld [vmem:[%s5 + $0x304] sm:$0xf]
          %v1511 = vld [vmem:[%s5 + $0x308] sm:$0xf]
          %v1512 = vld [vmem:[%s5 + $0x30c] sm:$0xf]
          %v1513 = vld [vmem:[%s5 + $0x310] sm:$0xf]
          %v1514 = vld [vmem:[%s5 + $0x314] sm:$0xf]
          %v1515 = vld [vmem:[%s5 + $0x318] sm:$0xf]
          %v1516 = vld [vmem:[%s5 + $0x31c] sm:$0xf]
          %v1517 = vld [vmem:[%s5 + $0x320] sm:$0xf]
          %v1518 = vld [vmem:[%s5 + $0x324] sm:$0xf]
          %v1519 = vld [vmem:[%s5 + $0x328] sm:$0xf]
          %v1520 = vld [vmem:[%s5 + $0x32c] sm:$0xf]
          %v1521 = vld [vmem:[%s5 + $0x330] sm:$0xf]
          %v1522 = vld [vmem:[%s5 + $0x334] sm:$0xf]
          %v1523 = vld [vmem:[%s5 + $0x338] sm:$0xf]
          %v1524 = vld [vmem:[%s5 + $0x33c] sm:$0xf]
          %v1525 = vld [vmem:[%s5 + $0x340] sm:$0xf]
          %v1526 = vld [vmem:[%s5 + $0x344] sm:$0xf]
          %v1527 = vld [vmem:[%s5 + $0x348] sm:$0xf]
          %v1528 = vld [vmem:[%s5 + $0x34c] sm:$0xf]
          %v1529 = vld [vmem:[%s5 + $0x350] sm:$0xf]
          %v1530 = vld [vmem:[%s5 + $0x354] sm:$0xf]
          %v1531 = vld [vmem:[%s5 + $0x358] sm:$0xf]
          %v1532 = vld [vmem:[%s5 + $0x35c] sm:$0xf]
          %v1533 = vld [vmem:[%s5 + $0x360] sm:$0xf]
          %v1534 = vld [vmem:[%s5 + $0x364] sm:$0xf]
          %v1535 = vld [vmem:[%s5 + $0x368] sm:$0xf]
          %v1536 = vld [vmem:[%s5 + $0x36c] sm:$0xf]
          %v1537 = vld [vmem:[%s5 + $0x370] sm:$0xf]
          %v1538 = vld [vmem:[%s5 + $0x374] sm:$0xf]
          %v1539 = vld [vmem:[%s5 + $0x378] sm:$0xf]
          %v1540 = vld [vmem:[%s5 + $0x37c] sm:$0xf]
          %v1541 = vld [vmem:[%s5 + $0x380] sm:$0xf]
          %v1542 = vld [vmem:[%s5 + $0x384] sm:$0xf]
          %v1543 = vld [vmem:[%s5 + $0x388] sm:$0xf]
          %v1544 = vld [vmem:[%s5 + $0x38c] sm:$0xf]
          %v1545 = vld [vmem:[%s5 + $0x390] sm:$0xf]
          %v1546 = vld [vmem:[%s5 + $0x394] sm:$0xf]
          %v1547 = vld [vmem:[%s5 + $0x398] sm:$0xf]
          %v1548 = vld [vmem:[%s5 + $0x39c] sm:$0xf]
          %v1549 = vld [vmem:[%s5 + $0x3a0] sm:$0xf]
          %v1550 = vld [vmem:[%s5 + $0x3a4] sm:$0xf]
          %v1551 = vld [vmem:[%s5 + $0x3a8] sm:$0xf]
          %v1552 = vld [vmem:[%s5 + $0x3ac] sm:$0xf]
          %v1553 = vld [vmem:[%s5 + $0x3b0] sm:$0xf]
          %v1554 = vld [vmem:[%s5 + $0x3b4] sm:$0xf]
          %v1555 = vld [vmem:[%s5 + $0x3b8] sm:$0xf]
          %v1556 = vld [vmem:[%s5 + $0x3bc] sm:$0xf]
          %v1557 = vld [vmem:[%s5 + $0x3c0] sm:$0xf]
          %v1558 = vld [vmem:[%s5 + $0x3c4] sm:$0xf]
          %v1559 = vld [vmem:[%s5 + $0x3c8] sm:$0xf]
          %v1560 = vld [vmem:[%s5 + $0x3cc] sm:$0xf]
          %v1561 = vld [vmem:[%s5 + $0x3d0] sm:$0xf]
          %v1562 = vld [vmem:[%s5 + $0x3d4] sm:$0xf]
          %v1563 = vld [vmem:[%s5 + $0x3d8] sm:$0xf]
          %v1564 = vld [vmem:[%s5 + $0x3dc] sm:$0xf]
          %v1565 = vld [vmem:[%s5 + $0x3e0] sm:$0xf]
          %v1566 = vld [vmem:[%s5 + $0x3e4] sm:$0xf]
          %v1567 = vld [vmem:[%s5 + $0x3e8] sm:$0xf]
          %v1568 = vld [vmem:[%s5 + $0x3ec] sm:$0xf]
          %v1569 = vld [vmem:[%s5 + $0x3f0] sm:$0xf]
          %v1570 = vld [vmem:[%s5 + $0x3f4] sm:$0xf]
          %v1571 = vld [vmem:[%s5 + $0x3f8] sm:$0xf]
          %v1572 = vld [vmem:[%s5 + $0x3fc] sm:$0xf]
          %v1573 = vld [vmem:[%s6] sm:$0x1]
          %v1575 = vlaneseq
          %v1576 = vshrl.u32 %v1575, 7
          %v1577 = vsub.s32 0, %v1576
          %v1578 = vrot.slane %v1573, %v1577
          %v1836 = vunpack.c.l.b16 %v1317
          %v1837 = vunpack.c.l.b16 %v1318
          %v1838 = vunpack.c.l.b16 %v1319
          %v1839 = vunpack.c.l.b16 %v1320
          %v1840 = vunpack.c.l.b16 %v1321
          %v1841 = vunpack.c.l.b16 %v1322
          %v1842 = vunpack.c.l.b16 %v1323
          %v1843 = vunpack.c.l.b16 %v1324
          %v1844 = vunpack.c.l.b16 %v1325
          %v1845 = vunpack.c.l.b16 %v1326
          %v1846 = vunpack.c.l.b16 %v1327
          %v1847 = vunpack.c.l.b16 %v1328
          %v1848 = vunpack.c.l.b16 %v1329
          %v1849 = vunpack.c.l.b16 %v1330
          %v1850 = vunpack.c.l.b16 %v1331
          %v1851 = vunpack.c.l.b16 %v1332
          %v1852 = vunpack.c.l.b16 %v1333
          %v1853 = vunpack.c.l.b16 %v1334
          %v1854 = vunpack.c.l.b16 %v1335
          %v1855 = vunpack.c.l.b16 %v1336
          %v1856 = vunpack.c.l.b16 %v1337
          %v1857 = vunpack.c.l.b16 %v1338
          %v1858 = vunpack.c.l.b16 %v1339
          %v1859 = vunpack.c.l.b16 %v1340
          %v1860 = vunpack.c.l.b16 %v1341
          %v1861 = vunpack.c.l.b16 %v1342
          %v1862 = vunpack.c.l.b16 %v1343
          %v1863 = vunpack.c.l.b16 %v1344
          %v1864 = vunpack.c.l.b16 %v1345
          %v1865 = vunpack.c.l.b16 %v1346
          %v1866 = vunpack.c.l.b16 %v1347
          %v1867 = vunpack.c.l.b16 %v1348
          %v1868 = vunpack.c.l.b16 %v1349
          %v1869 = vunpack.c.l.b16 %v1350
          %v1870 = vunpack.c.l.b16 %v1351
          %v1871 = vunpack.c.l.b16 %v1352
          %v1872 = vunpack.c.l.b16 %v1353
          %v1873 = vunpack.c.l.b16 %v1354
          %v1874 = vunpack.c.l.b16 %v1355
          %v1875 = vunpack.c.l.b16 %v1356
          %v1876 = vunpack.c.l.b16 %v1357
          %v1877 = vunpack.c.l.b16 %v1358
          %v1878 = vunpack.c.l.b16 %v1359
          %v1879 = vunpack.c.l.b16 %v1360
          %v1880 = vunpack.c.l.b16 %v1361
          %v1881 = vunpack.c.l.b16 %v1362
          %v1882 = vunpack.c.l.b16 %v1363
          %v1883 = vunpack.c.l.b16 %v1364
          %v1884 = vunpack.c.l.b16 %v1365
          %v1885 = vunpack.c.l.b16 %v1366
          %v1886 = vunpack.c.l.b16 %v1367
          %v1887 = vunpack.c.l.b16 %v1368
          %v1888 = vunpack.c.l.b16 %v1369
          %v1889 = vunpack.c.l.b16 %v1370
          %v1890 = vunpack.c.l.b16 %v1371
          %v1891 = vunpack.c.l.b16 %v1372
          %v1892 = vunpack.c.l.b16 %v1373
          %v1893 = vunpack.c.l.b16 %v1374
          %v1894 = vunpack.c.l.b16 %v1375
          %v1895 = vunpack.c.l.b16 %v1376
          %v1896 = vunpack.c.l.b16 %v1377
          %v1897 = vunpack.c.l.b16 %v1378
          %v1898 = vunpack.c.l.b16 %v1379
          %v1899 = vunpack.c.l.b16 %v1380
          %v1900 = vunpack.c.l.b16 %v1381
          %v1901 = vunpack.c.l.b16 %v1382
          %v1902 = vunpack.c.l.b16 %v1383
          %v1903 = vunpack.c.l.b16 %v1384
          %v1904 = vunpack.c.l.b16 %v1385
          %v1905 = vunpack.c.l.b16 %v1386
          %v1906 = vunpack.c.l.b16 %v1387
          %v1907 = vunpack.c.l.b16 %v1388
          %v1908 = vunpack.c.l.b16 %v1389
          %v1909 = vunpack.c.l.b16 %v1390
          %v1910 = vunpack.c.l.b16 %v1391
          %v1911 = vunpack.c.l.b16 %v1392
          %v1912 = vunpack.c.l.b16 %v1393
          %v1913 = vunpack.c.l.b16 %v1394
          %v1914 = vunpack.c.l.b16 %v1395
          %v1915 = vunpack.c.l.b16 %v1396
          %v1916 = vunpack.c.l.b16 %v1397
          %v1917 = vunpack.c.l.b16 %v1398
          %v1918 = vunpack.c.l.b16 %v1399
          %v1919 = vunpack.c.l.b16 %v1400
          %v1920 = vunpack.c.l.b16 %v1401
          %v1921 = vunpack.c.l.b16 %v1402
          %v1922 = vunpack.c.l.b16 %v1403
          %v1923 = vunpack.c.l.b16 %v1404
          %v1924 = vunpack.c.l.b16 %v1405
          %v1925 = vunpack.c.l.b16 %v1406
          %v1926 = vunpack.c.l.b16 %v1407
          %v1927 = vunpack.c.l.b16 %v1408
          %v1928 = vunpack.c.l.b16 %v1409
          %v1929 = vunpack.c.l.b16 %v1410
          %v1930 = vunpack.c.l.b16 %v1411
          %v1931 = vunpack.c.l.b16 %v1412
          %v1932 = vunpack.c.l.b16 %v1413
          %v1933 = vunpack.c.l.b16 %v1414
          %v1934 = vunpack.c.l.b16 %v1415
          %v1935 = vunpack.c.l.b16 %v1416
          %v1936 = vunpack.c.l.b16 %v1417
          %v1937 = vunpack.c.l.b16 %v1418
          %v1938 = vunpack.c.l.b16 %v1419
          %v1939 = vunpack.c.l.b16 %v1420
          %v1940 = vunpack.c.l.b16 %v1421
          %v1941 = vunpack.c.l.b16 %v1422
          %v1942 = vunpack.c.l.b16 %v1423
          %v1943 = vunpack.c.l.b16 %v1424
          %v1944 = vunpack.c.l.b16 %v1425
          %v1945 = vunpack.c.l.b16 %v1426
          %v1946 = vunpack.c.l.b16 %v1427
          %v1947 = vunpack.c.l.b16 %v1428
          %v1948 = vunpack.c.l.b16 %v1429
          %v1949 = vunpack.c.l.b16 %v1430
          %v1950 = vunpack.c.l.b16 %v1431
          %v1951 = vunpack.c.l.b16 %v1432
          %v1952 = vunpack.c.l.b16 %v1433
          %v1953 = vunpack.c.l.b16 %v1434
          %v1954 = vunpack.c.l.b16 %v1435
          %v1955 = vunpack.c.l.b16 %v1436
          %v1956 = vunpack.c.l.b16 %v1437
          %v1957 = vunpack.c.l.b16 %v1438
          %v1958 = vunpack.c.l.b16 %v1439
          %v1959 = vunpack.c.l.b16 %v1440
          %v1960 = vunpack.c.l.b16 %v1441
          %v1961 = vunpack.c.l.b16 %v1442
          %v1962 = vunpack.c.l.b16 %v1443
          %v1963 = vunpack.c.l.b16 %v1444
          %v1964 = vunpack.c.l.b16 %v1445
          %v1965 = vunpack.c.l.b16 %v1446
          %v1966 = vunpack.c.l.b16 %v1447
          %v1967 = vunpack.c.l.b16 %v1448
          %v1968 = vunpack.c.l.b16 %v1449
          %v1969 = vunpack.c.l.b16 %v1450
          %v1970 = vunpack.c.l.b16 %v1451
          %v1971 = vunpack.c.l.b16 %v1452
          %v1972 = vunpack.c.l.b16 %v1453
          %v1973 = vunpack.c.l.b16 %v1454
          %v1974 = vunpack.c.l.b16 %v1455
          %v1975 = vunpack.c.l.b16 %v1456
          %v1976 = vunpack.c.l.b16 %v1457
          %v1977 = vunpack.c.l.b16 %v1458
          %v1978 = vunpack.c.l.b16 %v1459
          %v1979 = vunpack.c.l.b16 %v1460
          %v1980 = vunpack.c.l.b16 %v1461
          %v1981 = vunpack.c.l.b16 %v1462
          %v1982 = vunpack.c.l.b16 %v1463
          %v1983 = vunpack.c.l.b16 %v1464
          %v1984 = vunpack.c.l.b16 %v1465
          %v1985 = vunpack.c.l.b16 %v1466
          %v1986 = vunpack.c.l.b16 %v1467
          %v1987 = vunpack.c.l.b16 %v1468
          %v1988 = vunpack.c.l.b16 %v1469
          %v1989 = vunpack.c.l.b16 %v1470
          %v1990 = vunpack.c.l.b16 %v1471
          %v1991 = vunpack.c.l.b16 %v1472
          %v1992 = vunpack.c.l.b16 %v1473
          %v1993 = vunpack.c.l.b16 %v1474
          %v1994 = vunpack.c.l.b16 %v1475
          %v1995 = vunpack.c.l.b16 %v1476
          %v1996 = vunpack.c.l.b16 %v1477
          %v1997 = vunpack.c.l.b16 %v1478
          %v1998 = vunpack.c.l.b16 %v1479
          %v1999 = vunpack.c.l.b16 %v1480
          %v2000 = vunpack.c.l.b16 %v1481
          %v2001 = vunpack.c.l.b16 %v1482
          %v2002 = vunpack.c.l.b16 %v1483
          %v2003 = vunpack.c.l.b16 %v1484
          %v2004 = vunpack.c.l.b16 %v1485
          %v2005 = vunpack.c.l.b16 %v1486
          %v2006 = vunpack.c.l.b16 %v1487
          %v2007 = vunpack.c.l.b16 %v1488
          %v2008 = vunpack.c.l.b16 %v1489
          %v2009 = vunpack.c.l.b16 %v1490
          %v2010 = vunpack.c.l.b16 %v1491
          %v2011 = vunpack.c.l.b16 %v1492
          %v2012 = vunpack.c.l.b16 %v1493
          %v2013 = vunpack.c.l.b16 %v1494
          %v2014 = vunpack.c.l.b16 %v1495
          %v2015 = vunpack.c.l.b16 %v1496
          %v2016 = vunpack.c.l.b16 %v1497
          %v2017 = vunpack.c.l.b16 %v1498
          %v2018 = vunpack.c.l.b16 %v1499
          %v2019 = vunpack.c.l.b16 %v1500
          %v2020 = vunpack.c.l.b16 %v1501
          %v2021 = vunpack.c.l.b16 %v1502
          %v2022 = vunpack.c.l.b16 %v1503
          %v2023 = vunpack.c.l.b16 %v1504
          %v2024 = vunpack.c.l.b16 %v1505
          %v2025 = vunpack.c.l.b16 %v1506
          %v2026 = vunpack.c.l.b16 %v1507
          %v2027 = vunpack.c.l.b16 %v1508
          %v2028 = vunpack.c.l.b16 %v1509
          %v2029 = vunpack.c.l.b16 %v1510
          %v2030 = vunpack.c.l.b16 %v1511
          %v2031 = vunpack.c.l.b16 %v1512
          %v2032 = vunpack.c.l.b16 %v1513
          %v2033 = vunpack.c.l.b16 %v1514
          %v2034 = vunpack.c.l.b16 %v1515
          %v2035 = vunpack.c.l.b16 %v1516
          %v2036 = vunpack.c.l.b16 %v1517
          %v2037 = vunpack.c.l.b16 %v1518
          %v2038 = vunpack.c.l.b16 %v1519
          %v2039 = vunpack.c.l.b16 %v1520
          %v2040 = vunpack.c.l.b16 %v1521
          %v2041 = vunpack.c.l.b16 %v1522
          %v2042 = vunpack.c.l.b16 %v1523
          %v2043 = vunpack.c.l.b16 %v1524
          %v2044 = vunpack.c.l.b16 %v1525
          %v2045 = vunpack.c.l.b16 %v1526
          %v2046 = vunpack.c.l.b16 %v1527
          %v2047 = vunpack.c.l.b16 %v1528
          %v2048 = vunpack.c.l.b16 %v1529
          %v2049 = vunpack.c.l.b16 %v1530
          %v2050 = vunpack.c.l.b16 %v1531
          %v2051 = vunpack.c.l.b16 %v1532
          %v2052 = vunpack.c.l.b16 %v1533
          %v2053 = vunpack.c.l.b16 %v1534
          %v2054 = vunpack.c.l.b16 %v1535
          %v2055 = vunpack.c.l.b16 %v1536
          %v2056 = vunpack.c.l.b16 %v1537
          %v2057 = vunpack.c.l.b16 %v1538
          %v2058 = vunpack.c.l.b16 %v1539
          %v2059 = vunpack.c.l.b16 %v1540
          %v2060 = vunpack.c.l.b16 %v1541
          %v2061 = vunpack.c.l.b16 %v1542
          %v2062 = vunpack.c.l.b16 %v1543
          %v2063 = vunpack.c.l.b16 %v1544
          %v2064 = vunpack.c.l.b16 %v1545
          %v2065 = vunpack.c.l.b16 %v1546
          %v2066 = vunpack.c.l.b16 %v1547
          %v2067 = vunpack.c.l.b16 %v1548
          %v2068 = vunpack.c.l.b16 %v1549
          %v2069 = vunpack.c.l.b16 %v1550
          %v2070 = vunpack.c.l.b16 %v1551
          %v2071 = vunpack.c.l.b16 %v1552
          %v2072 = vunpack.c.l.b16 %v1553
          %v2073 = vunpack.c.l.b16 %v1554
          %v2074 = vunpack.c.l.b16 %v1555
          %v2075 = vunpack.c.l.b16 %v1556
          %v2076 = vunpack.c.l.b16 %v1557
          %v2077 = vunpack.c.l.b16 %v1558
          %v2078 = vunpack.c.l.b16 %v1559
          %v2079 = vunpack.c.l.b16 %v1560
          %v2080 = vunpack.c.l.b16 %v1561
          %v2081 = vunpack.c.l.b16 %v1562
          %v2082 = vunpack.c.l.b16 %v1563
          %v2083 = vunpack.c.l.b16 %v1564
          %v2084 = vunpack.c.l.b16 %v1565
          %v2085 = vunpack.c.l.b16 %v1566
          %v2086 = vunpack.c.l.b16 %v1567
          %v2087 = vunpack.c.l.b16 %v1568
          %v2088 = vunpack.c.l.b16 %v1569
          %v2089 = vunpack.c.l.b16 %v1570
          %v2090 = vunpack.c.l.b16 %v1571
          %v2091 = vunpack.c.l.b16 %v1572
          %v2092 = vpack.c.b16 %v1837, %v1836
          %v2093 = vpack.c.b16 %v1839, %v1838
          %v2094 = vpack.c.b16 %v1841, %v1840
          %v2095 = vpack.c.b16 %v1843, %v1842
          %v2096 = vpack.c.b16 %v1845, %v1844
          %v2097 = vpack.c.b16 %v1847, %v1846
          %v2098 = vpack.c.b16 %v1849, %v1848
          %v2099 = vpack.c.b16 %v1851, %v1850
          %v2100 = vpack.c.b16 %v1853, %v1852
          %v2101 = vpack.c.b16 %v1855, %v1854
          %v2102 = vpack.c.b16 %v1857, %v1856
          %v2103 = vpack.c.b16 %v1859, %v1858
          %v2104 = vpack.c.b16 %v1861, %v1860
          %v2105 = vpack.c.b16 %v1863, %v1862
          %v2106 = vpack.c.b16 %v1865, %v1864
          %v2107 = vpack.c.b16 %v1867, %v1866
          %v2108 = vpack.c.b16 %v1869, %v1868
          %v2109 = vpack.c.b16 %v1871, %v1870
          %v2110 = vpack.c.b16 %v1873, %v1872
          %v2111 = vpack.c.b16 %v1875, %v1874
          %v2112 = vpack.c.b16 %v1877, %v1876
          %v2113 = vpack.c.b16 %v1879, %v1878
          %v2114 = vpack.c.b16 %v1881, %v1880
          %v2115 = vpack.c.b16 %v1883, %v1882
          %v2116 = vpack.c.b16 %v1885, %v1884
          %v2117 = vpack.c.b16 %v1887, %v1886
          %v2118 = vpack.c.b16 %v1889, %v1888
          %v2119 = vpack.c.b16 %v1891, %v1890
          %v2120 = vpack.c.b16 %v1893, %v1892
          %v2121 = vpack.c.b16 %v1895, %v1894
          %v2122 = vpack.c.b16 %v1897, %v1896
          %v2123 = vpack.c.b16 %v1899, %v1898
          %v2124 = vpack.c.b16 %v1901, %v1900
          %v2125 = vpack.c.b16 %v1903, %v1902
          %v2126 = vpack.c.b16 %v1905, %v1904
          %v2127 = vpack.c.b16 %v1907, %v1906
          %v2128 = vpack.c.b16 %v1909, %v1908
          %v2129 = vpack.c.b16 %v1911, %v1910
          %v2130 = vpack.c.b16 %v1913, %v1912
          %v2131 = vpack.c.b16 %v1915, %v1914
          %v2132 = vpack.c.b16 %v1917, %v1916
          %v2133 = vpack.c.b16 %v1919, %v1918
          %v2134 = vpack.c.b16 %v1921, %v1920
          %v2135 = vpack.c.b16 %v1923, %v1922
          %v2136 = vpack.c.b16 %v1925, %v1924
          %v2137 = vpack.c.b16 %v1927, %v1926
          %v2138 = vpack.c.b16 %v1929, %v1928
          %v2139 = vpack.c.b16 %v1931, %v1930
          %v2140 = vpack.c.b16 %v1933, %v1932
          %v2141 = vpack.c.b16 %v1935, %v1934
          %v2142 = vpack.c.b16 %v1937, %v1936
          %v2143 = vpack.c.b16 %v1939, %v1938
          %v2144 = vpack.c.b16 %v1941, %v1940
          %v2145 = vpack.c.b16 %v1943, %v1942
          %v2146 = vpack.c.b16 %v1945, %v1944
          %v2147 = vpack.c.b16 %v1947, %v1946
          %v2148 = vpack.c.b16 %v1949, %v1948
          %v2149 = vpack.c.b16 %v1951, %v1950
          %v2150 = vpack.c.b16 %v1953, %v1952
          %v2151 = vpack.c.b16 %v1955, %v1954
          %v2152 = vpack.c.b16 %v1957, %v1956
          %v2153 = vpack.c.b16 %v1959, %v1958
          %v2154 = vpack.c.b16 %v1961, %v1960
          %v2155 = vpack.c.b16 %v1963, %v1962
          %v2156 = vpack.c.b16 %v1965, %v1964
          %v2157 = vpack.c.b16 %v1967, %v1966
          %v2158 = vpack.c.b16 %v1969, %v1968
          %v2159 = vpack.c.b16 %v1971, %v1970
          %v2160 = vpack.c.b16 %v1973, %v1972
          %v2161 = vpack.c.b16 %v1975, %v1974
          %v2162 = vpack.c.b16 %v1977, %v1976
          %v2163 = vpack.c.b16 %v1979, %v1978
          %v2164 = vpack.c.b16 %v1981, %v1980
          %v2165 = vpack.c.b16 %v1983, %v1982
          %v2166 = vpack.c.b16 %v1985, %v1984
          %v2167 = vpack.c.b16 %v1987, %v1986
          %v2168 = vpack.c.b16 %v1989, %v1988
          %v2169 = vpack.c.b16 %v1991, %v1990
          %v2170 = vpack.c.b16 %v1993, %v1992
          %v2171 = vpack.c.b16 %v1995, %v1994
          %v2172 = vpack.c.b16 %v1997, %v1996
          %v2173 = vpack.c.b16 %v1999, %v1998
          %v2174 = vpack.c.b16 %v2001, %v2000
          %v2175 = vpack.c.b16 %v2003, %v2002
          %v2176 = vpack.c.b16 %v2005, %v2004
          %v2177 = vpack.c.b16 %v2007, %v2006
          %v2178 = vpack.c.b16 %v2009, %v2008
          %v2179 = vpack.c.b16 %v2011, %v2010
          %v2180 = vpack.c.b16 %v2013, %v2012
          %v2181 = vpack.c.b16 %v2015, %v2014
          %v2182 = vpack.c.b16 %v2017, %v2016
          %v2183 = vpack.c.b16 %v2019, %v2018
          %v2184 = vpack.c.b16 %v2021, %v2020
          %v2185 = vpack.c.b16 %v2023, %v2022
          %v2186 = vpack.c.b16 %v2025, %v2024
          %v2187 = vpack.c.b16 %v2027, %v2026
          %v2188 = vpack.c.b16 %v2029, %v2028
          %v2189 = vpack.c.b16 %v2031, %v2030
          %v2190 = vpack.c.b16 %v2033, %v2032
          %v2191 = vpack.c.b16 %v2035, %v2034
          %v2192 = vpack.c.b16 %v2037, %v2036
          %v2193 = vpack.c.b16 %v2039, %v2038
          %v2194 = vpack.c.b16 %v2041, %v2040
          %v2195 = vpack.c.b16 %v2043, %v2042
          %v2196 = vpack.c.b16 %v2045, %v2044
          %v2197 = vpack.c.b16 %v2047, %v2046
          %v2198 = vpack.c.b16 %v2049, %v2048
          %v2199 = vpack.c.b16 %v2051, %v2050
          %v2200 = vpack.c.b16 %v2053, %v2052
          %v2201 = vpack.c.b16 %v2055, %v2054
          %v2202 = vpack.c.b16 %v2057, %v2056
          %v2203 = vpack.c.b16 %v2059, %v2058
          %v2204 = vpack.c.b16 %v2061, %v2060
          %v2205 = vpack.c.b16 %v2063, %v2062
          %v2206 = vpack.c.b16 %v2065, %v2064
          %v2207 = vpack.c.b16 %v2067, %v2066
          %v2208 = vpack.c.b16 %v2069, %v2068
          %v2209 = vpack.c.b16 %v2071, %v2070
          %v2210 = vpack.c.b16 %v2073, %v2072
          %v2211 = vpack.c.b16 %v2075, %v2074
          %v2212 = vpack.c.b16 %v2077, %v2076
          %v2213 = vpack.c.b16 %v2079, %v2078
          %v2214 = vpack.c.b16 %v2081, %v2080
          %v2215 = vpack.c.b16 %v2083, %v2082
          %v2216 = vpack.c.b16 %v2085, %v2084
          %v2217 = vpack.c.b16 %v2087, %v2086
          %v2218 = vpack.c.b16 %v2089, %v2088
          %v2219 = vpack.c.b16 %v2091, %v2090
          %2348 = vmatprep.subr.bf16.mxu0 0
          %2349 = vmatpush1.bf16.msra.mxu0 %v2092
          %2350 = vmatprep.subr.bf16.mxu0 0
          %2351 = vmatpush1.bf16.msra.mxu0 %v2093
          %2352 = vmatprep.subr.bf16.mxu0 0
          %2353 = vmatpush1.bf16.msra.mxu0 %v2094
          %2354 = vmatprep.subr.bf16.mxu0 0
          %2355 = vmatpush1.bf16.msra.mxu0 %v2095
          %2356 = vmatprep.subr.bf16.mxu0 0
          %2357 = vmatpush1.bf16.msra.mxu0 %v2096
          %2358 = vmatprep.subr.bf16.mxu0 0
          %2359 = vmatpush1.bf16.msra.mxu0 %v2097
          %2360 = vmatprep.subr.bf16.mxu0 0
          %2361 = vmatpush1.bf16.msra.mxu0 %v2098
          %2362 = vmatprep.subr.bf16.mxu0 0
          %2363 = vmatpush1.bf16.msra.mxu0 %v2099
          %2364 = vmatprep.subr.bf16.mxu0 0
          %2365 = vmatpush1.bf16.msra.mxu0 %v2100
          %2366 = vmatprep.subr.bf16.mxu0 0
          %2367 = vmatpush1.bf16.msra.mxu0 %v2101
          %2368 = vmatprep.subr.bf16.mxu0 0
          %2369 = vmatpush1.bf16.msra.mxu0 %v2102
          %2370 = vmatprep.subr.bf16.mxu0 0
          %2371 = vmatpush1.bf16.msra.mxu0 %v2103
          %2372 = vmatprep.subr.bf16.mxu0 0
          %2373 = vmatpush1.bf16.msra.mxu0 %v2104
          %2374 = vmatprep.subr.bf16.mxu0 0
          %2375 = vmatpush1.bf16.msra.mxu0 %v2105
          %2376 = vmatprep.subr.bf16.mxu0 0
          %2377 = vmatpush1.bf16.msra.mxu0 %v2106
          %2378 = vmatprep.subr.bf16.mxu0 0
          %2379 = vmatpush1.bf16.msra.mxu0 %v2107
          %2380 = vmatprep.mubr.bf16.mxu0 %v1302
          %2381 = vmatmul.mubr.bf16.gmra.mrb[0].mxu0 %v1301
          %v2382 = vpop.f32.mrb[0].mxu0
          %v2383 = vadd.f32 %v1578, %v2382
          %v2384 = vpop.f32.mrb[0].mxu0
          %v2385 = vpop.f32.mrb[0].mxu0
          %v2386 = vpop.f32.mrb[0].mxu0
          %2387 = vdwg.mxu0
          %2388 = vmatprep.subr.bf16.mxu0 0
          %2389 = vmatpush1.bf16.msra.mxu0 %v2108
          %2390 = vmatprep.subr.bf16.mxu0 0
          %2391 = vmatpush1.bf16.msra.mxu0 %v2109
          %2392 = vmatprep.subr.bf16.mxu0 0
          %2393 = vmatpush1.bf16.msra.mxu0 %v2110
          %2394 = vmatprep.subr.bf16.mxu0 0
          %2395 = vmatpush1.bf16.msra.mxu0 %v2111
          %2396 = vmatprep.subr.bf16.mxu0 0
          %2397 = vmatpush1.bf16.msra.mxu0 %v2112
          %2398 = vmatprep.subr.bf16.mxu0 0
          %2399 = vmatpush1.bf16.msra.mxu0 %v2113
          %2400 = vmatprep.subr.bf16.mxu0 0
          %2401 = vmatpush1.bf16.msra.mxu0 %v2114
          %2402 = vmatprep.subr.bf16.mxu0 0
          %2403 = vmatpush1.bf16.msra.mxu0 %v2115
          %2404 = vmatprep.subr.bf16.mxu0 0
          %2405 = vmatpush1.bf16.msra.mxu0 %v2116
          %2406 = vmatprep.subr.bf16.mxu0 0
          %2407 = vmatpush1.bf16.msra.mxu0 %v2117
          %2408 = vmatprep.subr.bf16.mxu0 0
          %2409 = vmatpush1.bf16.msra.mxu0 %v2118
          %2410 = vmatprep.subr.bf16.mxu0 0
          %2411 = vmatpush1.bf16.msra.mxu0 %v2119
          %2412 = vmatprep.subr.bf16.mxu0 0
          %2413 = vmatpush1.bf16.msra.mxu0 %v2120
          %2414 = vmatprep.subr.bf16.mxu0 0
          %2415 = vmatpush1.bf16.msra.mxu0 %v2121
          %2416 = vmatprep.subr.bf16.mxu0 0
          %2417 = vmatpush1.bf16.msra.mxu0 %v2122
          %2418 = vmatprep.subr.bf16.mxu0 0
          %2419 = vmatpush1.bf16.msra.mxu0 %v2123
          %2420 = vmatprep.mubr.bf16.mxu0 %v1304
          %2421 = vmatmul.mubr.bf16.gmra.mrb[0].mxu0 %v1303
          %v2422 = vpop.f32.mrb[0].mxu0
          %v2423 = vadd.f32 %v2383, %v2422
          %v2424 = vpop.f32.mrb[0].mxu0
          %v2425 = vpop.f32.mrb[0].mxu0
          %v2426 = vpop.f32.mrb[0].mxu0
          %2427 = vdwg.mxu0
          %2428 = vmatprep.subr.bf16.mxu0 0
          %2429 = vmatpush1.bf16.msra.mxu0 %v2124
          %2430 = vmatprep.subr.bf16.mxu0 0
          %2431 = vmatpush1.bf16.msra.mxu0 %v2125
          %2432 = vmatprep.subr.bf16.mxu0 0
          %2433 = vmatpush1.bf16.msra.mxu0 %v2126
          %2434 = vmatprep.subr.bf16.mxu0 0
          %2435 = vmatpush1.bf16.msra.mxu0 %v2127
          %2436 = vmatprep.subr.bf16.mxu0 0
          %2437 = vmatpush1.bf16.msra.mxu0 %v2128
          %2438 = vmatprep.subr.bf16.mxu0 0
          %2439 = vmatpush1.bf16.msra.mxu0 %v2129
          %2440 = vmatprep.subr.bf16.mxu0 0
          %2441 = vmatpush1.bf16.msra.mxu0 %v2130
          %2442 = vmatprep.subr.bf16.mxu0 0
          %2443 = vmatpush1.bf16.msra.mxu0 %v2131
          %2444 = vmatprep.subr.bf16.mxu0 0
          %2445 = vmatpush1.bf16.msra.mxu0 %v2132
          %2446 = vmatprep.subr.bf16.mxu0 0
          %2447 = vmatpush1.bf16.msra.mxu0 %v2133
          %2448 = vmatprep.subr.bf16.mxu0 0
          %2449 = vmatpush1.bf16.msra.mxu0 %v2134
          %2450 = vmatprep.subr.bf16.mxu0 0
          %2451 = vmatpush1.bf16.msra.mxu0 %v2135
          %2452 = vmatprep.subr.bf16.mxu0 0
          %2453 = vmatpush1.bf16.msra.mxu0 %v2136
          %2454 = vmatprep.subr.bf16.mxu0 0
          %2455 = vmatpush1.bf16.msra.mxu0 %v2137
          %2456 = vmatprep.subr.bf16.mxu0 0
          %2457 = vmatpush1.bf16.msra.mxu0 %v2138
          %2458 = vmatprep.subr.bf16.mxu0 0
          %2459 = vmatpush1.bf16.msra.mxu0 %v2139
          %2460 = vmatprep.mubr.bf16.mxu0 %v1306
          %2461 = vmatmul.mubr.bf16.gmra.mrb[0].mxu0 %v1305
          %v2462 = vpop.f32.mrb[0].mxu0
          %v2463 = vadd.f32 %v2423, %v2462
          %v2464 = vpop.f32.mrb[0].mxu0
          %v2465 = vpop.f32.mrb[0].mxu0
          %v2466 = vpop.f32.mrb[0].mxu0
          %2467 = vdwg.mxu0
          %2468 = vmatprep.subr.bf16.mxu0 0
          %2469 = vmatpush1.bf16.msra.mxu0 %v2140
          %2470 = vmatprep.subr.bf16.mxu0 0
          %2471 = vmatpush1.bf16.msra.mxu0 %v2141
          %2472 = vmatprep.subr.bf16.mxu0 0
          %2473 = vmatpush1.bf16.msra.mxu0 %v2142
          %2474 = vmatprep.subr.bf16.mxu0 0
          %2475 = vmatpush1.bf16.msra.mxu0 %v2143
          %2476 = vmatprep.subr.bf16.mxu0 0
          %2477 = vmatpush1.bf16.msra.mxu0 %v2144
          %2478 = vmatprep.subr.bf16.mxu0 0
          %2479 = vmatpush1.bf16.msra.mxu0 %v2145
          %2480 = vmatprep.subr.bf16.mxu0 0
          %2481 = vmatpush1.bf16.msra.mxu0 %v2146
          %2482 = vmatprep.subr.bf16.mxu0 0
          %2483 = vmatpush1.bf16.msra.mxu0 %v2147
          %2484 = vmatprep.subr.bf16.mxu0 0
          %2485 = vmatpush1.bf16.msra.mxu0 %v2148
          %2486 = vmatprep.subr.bf16.mxu0 0
          %2487 = vmatpush1.bf16.msra.mxu0 %v2149
          %2488 = vmatprep.subr.bf16.mxu0 0
          %2489 = vmatpush1.bf16.msra.mxu0 %v2150
          %2490 = vmatprep.subr.bf16.mxu0 0
          %2491 = vmatpush1.bf16.msra.mxu0 %v2151
          %2492 = vmatprep.subr.bf16.mxu0 0
          %2493 = vmatpush1.bf16.msra.mxu0 %v2152
          %2494 = vmatprep.subr.bf16.mxu0 0
          %2495 = vmatpush1.bf16.msra.mxu0 %v2153
          %2496 = vmatprep.subr.bf16.mxu0 0
          %2497 = vmatpush1.bf16.msra.mxu0 %v2154
          %2498 = vmatprep.subr.bf16.mxu0 0
          %2499 = vmatpush1.bf16.msra.mxu0 %v2155
          %2500 = vmatprep.mubr.bf16.mxu0 %v1308
          %2501 = vmatmul.mubr.bf16.gmra.mrb[0].mxu0 %v1307
          %v2502 = vpop.f32.mrb[0].mxu0
          %v2503 = vadd.f32 %v2463, %v2502
          %v2504 = vpop.f32.mrb[0].mxu0
          %v2505 = vpop.f32.mrb[0].mxu0
          %v2506 = vpop.f32.mrb[0].mxu0
          %2507 = vdwg.mxu0
          %2508 = vmatprep.subr.bf16.mxu0 0
          %2509 = vmatpush1.bf16.msra.mxu0 %v2156
          %2510 = vmatprep.subr.bf16.mxu0 0
          %2511 = vmatpush1.bf16.msra.mxu0 %v2157
          %2512 = vmatprep.subr.bf16.mxu0 0
          %2513 = vmatpush1.bf16.msra.mxu0 %v2158
          %2514 = vmatprep.subr.bf16.mxu0 0
          %2515 = vmatpush1.bf16.msra.mxu0 %v2159
          %2516 = vmatprep.subr.bf16.mxu0 0
          %2517 = vmatpush1.bf16.msra.mxu0 %v2160
          %2518 = vmatprep.subr.bf16.mxu0 0
          %2519 = vmatpush1.bf16.msra.mxu0 %v2161
          %2520 = vmatprep.subr.bf16.mxu0 0
          %2521 = vmatpush1.bf16.msra.mxu0 %v2162
          %2522 = vmatprep.subr.bf16.mxu0 0
          %2523 = vmatpush1.bf16.msra.mxu0 %v2163
          %2524 = vmatprep.subr.bf16.mxu0 0
          %2525 = vmatpush1.bf16.msra.mxu0 %v2164
          %2526 = vmatprep.subr.bf16.mxu0 0
          %2527 = vmatpush1.bf16.msra.mxu0 %v2165
          %2528 = vmatprep.subr.bf16.mxu0 0
          %2529 = vmatpush1.bf16.msra.mxu0 %v2166
          %2530 = vmatprep.subr.bf16.mxu0 0
          %2531 = vmatpush1.bf16.msra.mxu0 %v2167
          %2532 = vmatprep.subr.bf16.mxu0 0
          %2533 = vmatpush1.bf16.msra.mxu0 %v2168
          %2534 = vmatprep.subr.bf16.mxu0 0
          %2535 = vmatpush1.bf16.msra.mxu0 %v2169
          %2536 = vmatprep.subr.bf16.mxu0 0
          %2537 = vmatpush1.bf16.msra.mxu0 %v2170
          %2538 = vmatprep.subr.bf16.mxu0 0
          %2539 = vmatpush1.bf16.msra.mxu0 %v2171
          %2540 = vmatprep.mubr.bf16.mxu0 %v1310
          %2541 = vmatmul.mubr.bf16.gmra.mrb[0].mxu0 %v1309
          %v2542 = vpop.f32.mrb[0].mxu0
          %v2543 = vadd.f32 %v2503, %v2542
          %v2544 = vpop.f32.mrb[0].mxu0
          %v2545 = vpop.f32.mrb[0].mxu0
          %v2546 = vpop.f32.mrb[0].mxu0
          %2547 = vdwg.mxu0
          %2548 = vmatprep.subr.bf16.mxu0 0
          %2549 = vmatpush1.bf16.msra.mxu0 %v2172
          %2550 = vmatprep.subr.bf16.mxu0 0
          %2551 = vmatpush1.bf16.msra.mxu0 %v2173
          %2552 = vmatprep.subr.bf16.mxu0 0
          %2553 = vmatpush1.bf16.msra.mxu0 %v2174
          %2554 = vmatprep.subr.bf16.mxu0 0
          %2555 = vmatpush1.bf16.msra.mxu0 %v2175
          %2556 = vmatprep.subr.bf16.mxu0 0
          %2557 = vmatpush1.bf16.msra.mxu0 %v2176
          %2558 = vmatprep.subr.bf16.mxu0 0
          %2559 = vmatpush1.bf16.msra.mxu0 %v2177
          %2560 = vmatprep.subr.bf16.mxu0 0
          %2561 = vmatpush1.bf16.msra.mxu0 %v2178
          %2562 = vmatprep.subr.bf16.mxu0 0
          %2563 = vmatpush1.bf16.msra.mxu0 %v2179
          %2564 = vmatprep.subr.bf16.mxu0 0
          %2565 = vmatpush1.bf16.msra.mxu0 %v2180
          %2566 = vmatprep.subr.bf16.mxu0 0
          %2567 = vmatpush1.bf16.msra.mxu0 %v2181
          %2568 = vmatprep.subr.bf16.mxu0 0
          %2569 = vmatpush1.bf16.msra.mxu0 %v2182
          %2570 = vmatprep.subr.bf16.mxu0 0
          %2571 = vmatpush1.bf16.msra.mxu0 %v2183
          %2572 = vmatprep.subr.bf16.mxu0 0
          %2573 = vmatpush1.bf16.msra.mxu0 %v2184
          %2574 = vmatprep.subr.bf16.mxu0 0
          %2575 = vmatpush1.bf16.msra.mxu0 %v2185
          %2576 = vmatprep.subr.bf16.mxu0 0
          %2577 = vmatpush1.bf16.msra.mxu0 %v2186
          %2578 = vmatprep.subr.bf16.mxu0 0
          %2579 = vmatpush1.bf16.msra.mxu0 %v2187
          %2580 = vmatprep.mubr.bf16.mxu0 %v1312
          %2581 = vmatmul.mubr.bf16.gmra.mrb[0].mxu0 %v1311
          %v2582 = vpop.f32.mrb[0].mxu0
          %v2583 = vadd.f32 %v2543, %v2582
          %v2584 = vpop.f32.mrb[0].mxu0
          %v2585 = vpop.f32.mrb[0].mxu0
          %v2586 = vpop.f32.mrb[0].mxu0
          %2587 = vdwg.mxu0
          %2588 = vmatprep.subr.bf16.mxu0 0
          %2589 = vmatpush1.bf16.msra.mxu0 %v2188
          %2590 = vmatprep.subr.bf16.mxu0 0
          %2591 = vmatpush1.bf16.msra.mxu0 %v2189
          %2592 = vmatprep.subr.bf16.mxu0 0
          %2593 = vmatpush1.bf16.msra.mxu0 %v2190
          %2594 = vmatprep.subr.bf16.mxu0 0
          %2595 = vmatpush1.bf16.msra.mxu0 %v2191
          %2596 = vmatprep.subr.bf16.mxu0 0
          %2597 = vmatpush1.bf16.msra.mxu0 %v2192
          %2598 = vmatprep.subr.bf16.mxu0 0
          %2599 = vmatpush1.bf16.msra.mxu0 %v2193
          %2600 = vmatprep.subr.bf16.mxu0 0
          %2601 = vmatpush1.bf16.msra.mxu0 %v2194
          %2602 = vmatprep.subr.bf16.mxu0 0
          %2603 = vmatpush1.bf16.msra.mxu0 %v2195
          %2604 = vmatprep.subr.bf16.mxu0 0
          %2605 = vmatpush1.bf16.msra.mxu0 %v2196
          %2606 = vmatprep.subr.bf16.mxu0 0
          %2607 = vmatpush1.bf16.msra.mxu0 %v2197
          %2608 = vmatprep.subr.bf16.mxu0 0
          %2609 = vmatpush1.bf16.msra.mxu0 %v2198
          %2610 = vmatprep.subr.bf16.mxu0 0
          %2611 = vmatpush1.bf16.msra.mxu0 %v2199
          %2612 = vmatprep.subr.bf16.mxu0 0
          %2613 = vmatpush1.bf16.msra.mxu0 %v2200
          %2614 = vmatprep.subr.bf16.mxu0 0
          %2615 = vmatpush1.bf16.msra.mxu0 %v2201
          %2616 = vmatprep.subr.bf16.mxu0 0
          %2617 = vmatpush1.bf16.msra.mxu0 %v2202
          %2618 = vmatprep.subr.bf16.mxu0 0
          %2619 = vmatpush1.bf16.msra.mxu0 %v2203
          %2620 = vmatprep.mubr.bf16.mxu0 %v1314
          %2621 = vmatmul.mubr.bf16.gmra.mrb[0].mxu0 %v1313
          %v2622 = vpop.f32.mrb[0].mxu0
          %v2623 = vadd.f32 %v2583, %v2622
          %v2624 = vpop.f32.mrb[0].mxu0
          %v2625 = vpop.f32.mrb[0].mxu0
          %v2626 = vpop.f32.mrb[0].mxu0
          %2627 = vdwg.mxu0
          %2628 = vmatprep.subr.bf16.mxu0 0
          %2629 = vmatpush1.bf16.msra.mxu0 %v2204
          %2630 = vmatprep.subr.bf16.mxu0 0
          %2631 = vmatpush1.bf16.msra.mxu0 %v2205
          %2632 = vmatprep.subr.bf16.mxu0 0
          %2633 = vmatpush1.bf16.msra.mxu0 %v2206
          %2634 = vmatprep.subr.bf16.mxu0 0
          %2635 = vmatpush1.bf16.msra.mxu0 %v2207
          %2636 = vmatprep.subr.bf16.mxu0 0
          %2637 = vmatpush1.bf16.msra.mxu0 %v2208
          %2638 = vmatprep.subr.bf16.mxu0 0
          %2639 = vmatpush1.bf16.msra.mxu0 %v2209
          %2640 = vmatprep.subr.bf16.mxu0 0
          %2641 = vmatpush1.bf16.msra.mxu0 %v2210
          %2642 = vmatprep.subr.bf16.mxu0 0
          %2643 = vmatpush1.bf16.msra.mxu0 %v2211
          %2644 = vmatprep.subr.bf16.mxu0 0
          %2645 = vmatpush1.bf16.msra.mxu0 %v2212
          %2646 = vmatprep.subr.bf16.mxu0 0
          %2647 = vmatpush1.bf16.msra.mxu0 %v2213
          %2648 = vmatprep.subr.bf16.mxu0 0
          %2649 = vmatpush1.bf16.msra.mxu0 %v2214
          %2650 = vmatprep.subr.bf16.mxu0 0
          %2651 = vmatpush1.bf16.msra.mxu0 %v2215
          %2652 = vmatprep.subr.bf16.mxu0 0
          %2653 = vmatpush1.bf16.msra.mxu0 %v2216
          %2654 = vmatprep.subr.bf16.mxu0 0
          %2655 = vmatpush1.bf16.msra.mxu0 %v2217
          %2656 = vmatprep.subr.bf16.mxu0 0
          %2657 = vmatpush1.bf16.msra.mxu0 %v2218
          %2658 = vmatprep.subr.bf16.mxu0 0
          %2659 = vmatpush1.bf16.msra.mxu0 %v2219
          %2660 = vmatprep.mubr.bf16.mxu0 %v1316
          %2661 = vmatmul.mubr.bf16.gmra.mrb[0].mxu0 %v1315
          %v2662 = vpop.f32.mrb[0].mxu0
          %v2663 = vadd.f32 %v2623, %v2662
          %v2664 = vpop.f32.mrb[0].mxu0
          %v2665 = vpop.f32.mrb[0].mxu0
          %v2666 = vpop.f32.mrb[0].mxu0
          %2667 = vdwg.mxu0
          %v2668 = vmul.f32 %v1285, %v1285
          %v2669 = vmul.f32 %v1286, %v1286
          %v2670 = vmul.f32 %v1287, %v1287
          %v2671 = vmul.f32 %v1288, %v1288
          %v2672 = vmul.f32 %v1289, %v1289
          %v2673 = vmul.f32 %v1290, %v1290
          %v2674 = vmul.f32 %v1291, %v1291
          %v2675 = vmul.f32 %v1292, %v1292
          %v2676 = vmul.f32 %v1293, %v1293
          %v2677 = vmul.f32 %v1294, %v1294
          %v2678 = vmul.f32 %v1295, %v1295
          %v2679 = vmul.f32 %v1296, %v1296
          %v2680 = vmul.f32 %v1297, %v1297
          %v2681 = vmul.f32 %v1298, %v1298
          %v2682 = vmul.f32 %v1299, %v1299
          %v2683 = vmul.f32 %v1300, %v1300
          %vm2684 = vcmask 1041408
          %v2685 = vsel %vm2684, %v2668, 0.0
          %v2686 = vsel %vm2684, %v2669, 0.0
          %v2687 = vadd.f32 %v2685, %v2686
          %v2688 = vsel %vm2684, %v2670, 0.0
          %v2689 = vadd.f32 %v2687, %v2688
          %v2690 = vsel %vm2684, %v2671, 0.0
          %v2691 = vadd.f32 %v2689, %v2690
          %v2692 = vsel %vm2684, %v2672, 0.0
          %v2693 = vadd.f32 %v2691, %v2692
          %v2694 = vsel %vm2684, %v2673, 0.0
          %v2695 = vadd.f32 %v2693, %v2694
          %v2696 = vsel %vm2684, %v2674, 0.0
          %v2697 = vadd.f32 %v2695, %v2696
          %v2698 = vsel %vm2684, %v2675, 0.0
          %v2699 = vadd.f32 %v2697, %v2698
          %v2700 = vsel %vm2684, %v2676, 0.0
          %v2701 = vadd.f32 %v2699, %v2700
          %v2702 = vsel %vm2684, %v2677, 0.0
          %v2703 = vadd.f32 %v2701, %v2702
          %v2704 = vsel %vm2684, %v2678, 0.0
          %v2705 = vadd.f32 %v2703, %v2704
          %v2706 = vsel %vm2684, %v2679, 0.0
          %v2707 = vadd.f32 %v2705, %v2706
          %v2708 = vsel %vm2684, %v2680, 0.0
          %v2709 = vadd.f32 %v2707, %v2708
          %v2710 = vsel %vm2684, %v2681, 0.0
          %v2711 = vadd.f32 %v2709, %v2710
          %v2712 = vsel %vm2684, %v2682, 0.0
          %v2713 = vadd.f32 %v2711, %v2712
          %v2714 = vsel %vm2684, %v2683, 0.0
          %v2715 = vadd.f32 %v2713, %v2714
          %2716 = vadd.xlane.f32.xlu0 %v2715
          %v2717 = vpop.xlane.xlu0 %2716
          %v2718 = vmax.f32 %v2717, 1e-24
          %v2719 = vrsqrt.pop %v2718
          %vm2720 = vcmp.lt.s32.totalorder %v330, 4
          %v2721 = vmul.f32 %v2663, %v2719
          %v2722 = vsel %vm2720, %v2663, %v2721
          %vm2723 = vcmask 58368
          %2724 = vst.msk [vmem:[#allocation4] sm:$0x3] %vm2723, %v2722
        $region97: #{tpu_custom_call.1} parent=84 // pred_fallthru
          _
        // Predicated region
        $region98: #{tpu_custom_call.1} parent=84 // pred_check
          %p2725 = pneg %p184
        $region99: #{tpu_custom_call.1} parent=84 // pred_check_branch
          %2727 = sbr.rel (%p2725) target = $region101
        $region100: #{tpu_custom_call.1} parent=84 // pred_region
          %s2729 = ssub.s32 32, 32
          %2730 = vsyncadd [#allocation5], %s2729
          %s2732 = sshll.u32 [#allocation4], 4
          %s2733 = int_to_ptr.vmem [resolvable:$true] %s2732
          %2735 = dma.vmem_to_hbm [thread:$0]  %s2733, 32, %s7, [#allocation5]
        $region101: #{tpu_custom_call.1} parent=84 // pred_fallthru
          _
        // Predicated region
        $region102: #{tpu_custom_call.1} parent=84 // pred_check
          %p2736 = pneg %p184
        $region103: #{tpu_custom_call.1} parent=84 // pred_check_branch
          %2738 = sbr.rel (%p2736) target = $region105
        $region104: #{tpu_custom_call.1} parent=84 // pred_region
          %2739 = dma.done [#allocation5], 32
        $region105: #{tpu_custom_call.1} parent=84 // pred_fallthru
          _
      $region85: #{tpu_custom_call.1} parent=5 // pred_fallthru
        _
      %p2740 = scmp.le.s32.totalorder 2, %s14
      // Predicated region
      $region106: #{tpu_custom_call.1} parent=5 // pred_check
        %p2741 = pneg %p2740
      $region107: #{tpu_custom_call.1} parent=5 // pred_check_branch
        %2743 = sbr.rel (%p2741) target = $region109
      $region108: #{tpu_custom_call.1} parent=5 // pred_region
        %s2744 = ssub.s32 %s14, 2
      $region109: #{tpu_custom_call.1} parent=5 // pred_fallthru
        _
    $region6: #{tpu_custom_call.1} parent=1 // loop_footer
      %s18 = sadd.s32 1, %s14
    $region7: #{tpu_custom_call.1} parent=1 // loop_footer_branch
      %13 = sbr.rel target = $region3
    $region8: #{tpu_custom_call.1} parent=1 // loop_exit
      _
    %2745 = vsyncpa [#allocation5], 1
    %s2746 = scalar_lea.sflag [#allocation5], 1
    %2747 = vsyncpa %s2746, 1

</llo_original>
